<compile_context>
chip_gen: v7x
topology: tpu7x:2x2x1
jax: 0.10.0
libtpu: 0.0.40
codegen_flags: <defaults>
</compile_context>

<pallas_src>
import functools

import jax
import jax.numpy as jnp
from jax.experimental import pallas as pl
from jax.experimental.pallas import tpu as pltpu


def _round_up(n, m):
    return ((n + m - 1) // m) * m


def vanilla_g_kernel(x_ref, w1_ref, b1_ref, w2_ref, b2_ref, w3_ref, b3_ref, o_ref):
    # Layer 1: Linear(z_dim -> 256) + ReLU   (bf16 matmul, f32 accumulate)
    h1 = jnp.dot(x_ref[...], w1_ref[...], preferred_element_type=jnp.float32)
    h1 = jnp.maximum(h1 + b1_ref[...], 0.0).astype(jnp.bfloat16)
    # Layer 2: Linear(256 -> 256) + ReLU
    h2 = jnp.dot(h1, w2_ref[...], preferred_element_type=jnp.float32)
    h2 = jnp.maximum(h2 + b2_ref[...], 0.0).astype(jnp.bfloat16)
    # Layer 3: Linear(256 -> img_size*img_size) + Tanh (f32 epilogue; tanh -> EUP)
    h3 = jnp.dot(h2, w3_ref[...], preferred_element_type=jnp.float32)
    o_ref[...] = jnp.tanh(h3 + b3_ref[...])


@functools.partial(jax.jit, static_argnames=("img_size", "tile_b"))
def vanilla_g_forward(x, params, img_size, tile_b=256):
    """x: (B, z_dim) float32 -> (B, 1, img_size, img_size) float32."""
    w1, b1, w2, b2, w3, b3 = params
    B, z_dim = x.shape
    hidden = w1.shape[1]
    out_dim = img_size * img_size

    # Lane/MXU-friendly padded sizes.
    zp = _round_up(z_dim, 128)           # K of layer 1 (100 -> 128)
    out_p = _round_up(out_dim, 128)      # lane-dense output width (784 -> 896)
    tile_b = min(tile_b, _round_up(B, 128))  # don't over-pad small batches
    b_pad = _round_up(B, tile_b)

    # Pad + cast (zero padding contributes nothing to the matmuls).
    xp = jnp.zeros((b_pad, zp), jnp.bfloat16).at[:B, :z_dim].set(
        x.astype(jnp.bfloat16))
    w1p = jnp.zeros((zp, hidden), jnp.bfloat16).at[:z_dim, :].set(
        w1.astype(jnp.bfloat16))
    w2p = w2.astype(jnp.bfloat16)
    w3p = jnp.zeros((hidden, out_p), jnp.bfloat16).at[:, :out_dim].set(
        w3.astype(jnp.bfloat16))
    b3p = jnp.zeros((1, out_p), jnp.float32).at[:, :out_dim].set(b3)

    grid = (b_pad // tile_b,)
    const = lambda i: (0, 0)   # weights/biases pinned in VMEM across batch tiles

    out = pl.pallas_call(
        vanilla_g_kernel,
        out_shape=jax.ShapeDtypeStruct((b_pad, out_p), jnp.float32),
        grid=grid,
        in_specs=[
            pl.BlockSpec((tile_b, zp), lambda i: (i, 0)),   # x tile (pipelined)
            pl.BlockSpec((zp, hidden), const),              # w1
            pl.BlockSpec((1, hidden), const),               # b1
            pl.BlockSpec((hidden, hidden), const),          # w2
            pl.BlockSpec((1, hidden), const),               # b2
            pl.BlockSpec((hidden, out_p), const),           # w3
            pl.BlockSpec((1, out_p), const),                # b3
        ],
        out_specs=pl.BlockSpec((tile_b, out_p), lambda i: (i, 0)),
        compiler_params=pltpu.CompilerParams(
            dimension_semantics=("parallel",)),
    )(xp, w1p, b1, w2p, b2, w3p, b3p)

    # out.view(batch_size, 1, img_size, img_size) after stripping the padding.
    return out[:B, :out_dim].reshape(B, 1, img_size, img_size)


def init_params(key, z_dim, img_size, hidden=256):
    """Deterministic PyTorch-Linear-like init: U(-1/sqrt(fan_in), 1/sqrt(fan_in)).

    Weights stored transposed relative to PyTorch: shape (in, out)."""
    out_dim = img_size * img_size
    keys = jax.random.split(key, 6)

    def lin(kw, kb, fan_in, fan_out):
        bound = 1.0 / jnp.sqrt(fan_in)
        w = jax.random.uniform(kw, (fan_in, fan_out), jnp.float32, -bound, bound)
        b = jax.random.uniform(kb, (1, fan_out), jnp.float32, -bound, bound)
        return w, b

    w1, b1 = lin(keys[0], keys[1], z_dim, hidden)
    w2, b2 = lin(keys[2], keys[3], hidden, hidden)
    w3, b3 = lin(keys[4], keys[5], hidden, out_dim)
    return (w1, b1, w2, b2, w3, b3)


if __name__ == "__main__":
    # Shapes from the PyTorch module: batch_size=100, z_dim=100, img_size=28.
    batch = 100
    z_dim = 100
    img_size = 28   # final linear out_features = 784 (padded to 896 in-kernel)

    key = jax.random.PRNGKey(0)
    k_x, k_p = jax.random.split(key)
    x = jax.random.normal(k_x, (batch, z_dim), dtype=jnp.float32)
    params = init_params(k_p, z_dim, img_size)

    out = vanilla_g_forward(x, params, img_size)
    out = jax.block_until_ready(out)

    # Pure-JAX f32 reference of the same forward pass.
    w1, b1, w2, b2, w3, b3 = params
    h1 = jnp.maximum(x @ w1 + b1, 0.0)
    h2 = jnp.maximum(h1 @ w2 + b2, 0.0)
    ref = jnp.tanh(h2 @ w3 + b3).reshape(batch, 1, img_size, img_size)

    assert out.shape == (batch, 1, img_size, img_size)
    # bf16 matmul inputs with f32 accumulation -> loosened tolerance vs f32 ref.
    assert jnp.allclose(out, ref, atol=2e-2, rtol=2e-2)

    print("KERNEL_OK")
</pallas_src>

<mosaic_0001>
module attributes {stable_mosaic.version = 11 : i64} {
  func.func @vanilla_g_kernel(%arg0: i32, %arg1: memref<128x128xbf16, #tpu.memory_space<vmem>>, %arg2: memref<128x256xbf16, #tpu.memory_space<vmem>>, %arg3: memref<1x256xf32, #tpu.memory_space<vmem>>, %arg4: memref<256x256xbf16, #tpu.memory_space<vmem>>, %arg5: memref<1x256xf32, #tpu.memory_space<vmem>>, %arg6: memref<256x896xbf16, #tpu.memory_space<vmem>>, %arg7: memref<1x896xf32, #tpu.memory_space<vmem>>, %arg8: memref<128x896xf32, #tpu.memory_space<vmem>>) attributes {dimension_semantics = [#tpu.dimension_semantics<parallel>], iteration_bounds = array<i64: 1>, scalar_prefetch = 0 : i64, scratch_operands = 0 : i64, tpu.core_type = #tpu.core_type<tc>, window_params = [{transform_indices = @transform_0, window_bounds = array<i64: 128, 128>}, {pipeline_mode = #tpu.pipeline_mode<synchronous>, transform_indices = @transform_1, window_bounds = array<i64: 128, 256>}, {pipeline_mode = #tpu.pipeline_mode<synchronous>, transform_indices = @transform_2, window_bounds = array<i64: 1, 256>}, {pipeline_mode = #tpu.pipeline_mode<synchronous>, transform_indices = @transform_3, window_bounds = array<i64: 256, 256>}, {pipeline_mode = #tpu.pipeline_mode<synchronous>, transform_indices = @transform_4, window_bounds = array<i64: 1, 256>}, {pipeline_mode = #tpu.pipeline_mode<synchronous>, transform_indices = @transform_5, window_bounds = array<i64: 256, 896>}, {pipeline_mode = #tpu.pipeline_mode<synchronous>, transform_indices = @transform_6, window_bounds = array<i64: 1, 896>}, {transform_indices = @transform_7, window_bounds = array<i64: 128, 896>}]} {
    %c0 = arith.constant 0 : index
    %c0_0 = arith.constant 0 : index
    %0 = vector.load %arg1[%c0, %c0_0] : memref<128x128xbf16, #tpu.memory_space<vmem>>, vector<128x128xbf16>
    %c0_1 = arith.constant 0 : index
    %c0_2 = arith.constant 0 : index
    %1 = vector.load %arg2[%c0_1, %c0_2] : memref<128x256xbf16, #tpu.memory_space<vmem>>, vector<128x256xbf16>
    %cst = arith.constant dense<0.000000e+00> : vector<128x256xf32>
    %2 = tpu.matmul %0, %1, %cst {dimension_numbers = #tpu.dot_dimension_numbers<[1], [0], [0], [1], [0, 0, 1, 1], [], []>} : vector<128x128xbf16>, vector<128x256xbf16>, vector<128x256xf32> -> vector<128x256xf32>
    %c0_3 = arith.constant 0 : index
    %c0_4 = arith.constant 0 : index
    %3 = vector.load %arg3[%c0_3, %c0_4] : memref<1x256xf32, #tpu.memory_space<vmem>>, vector<1x256xf32>
    %4 = vector.broadcast %3 : vector<1x256xf32> to vector<128x256xf32>
    %5 = arith.addf %2, %4 : vector<128x256xf32>
    %cst_5 = arith.constant 0.000000e+00 : f32
    %6 = vector.broadcast %cst_5 : f32 to vector<128x256xf32>
    %7 = arith.maximumf %5, %6 : vector<128x256xf32>
    %8 = arith.truncf %7 : vector<128x256xf32> to vector<128x256xbf16>
    %c0_6 = arith.constant 0 : index
    %c0_7 = arith.constant 0 : index
    %9 = vector.load %arg4[%c0_6, %c0_7] : memref<256x256xbf16, #tpu.memory_space<vmem>>, vector<256x256xbf16>
    %cst_8 = arith.constant dense<0.000000e+00> : vector<128x256xf32>
    %10 = tpu.matmul %8, %9, %cst_8 {dimension_numbers = #tpu.dot_dimension_numbers<[1], [0], [0], [1], [0, 0, 1, 1], [], []>} : vector<128x256xbf16>, vector<256x256xbf16>, vector<128x256xf32> -> vector<128x256xf32>
    %c0_9 = arith.constant 0 : index
    %c0_10 = arith.constant 0 : index
    %11 = vector.load %arg5[%c0_9, %c0_10] : memref<1x256xf32, #tpu.memory_space<vmem>>, vector<1x256xf32>
    %12 = vector.broadcast %11 : vector<1x256xf32> to vector<128x256xf32>
    %13 = arith.addf %10, %12 : vector<128x256xf32>
    %cst_11 = arith.constant 0.000000e+00 : f32
    %14 = vector.broadcast %cst_11 : f32 to vector<128x256xf32>
    %15 = arith.maximumf %13, %14 : vector<128x256xf32>
    %16 = arith.truncf %15 : vector<128x256xf32> to vector<128x256xbf16>
    %c0_12 = arith.constant 0 : index
    %c0_13 = arith.constant 0 : index
    %17 = vector.load %arg6[%c0_12, %c0_13] : memref<256x896xbf16, #tpu.memory_space<vmem>>, vector<256x896xbf16>
    %cst_14 = arith.constant dense<0.000000e+00> : vector<128x896xf32>
    %18 = tpu.matmul %16, %17, %cst_14 {dimension_numbers = #tpu.dot_dimension_numbers<[1], [0], [0], [1], [0, 0, 1, 1], [], []>} : vector<128x256xbf16>, vector<256x896xbf16>, vector<128x896xf32> -> vector<128x896xf32>
    %c0_15 = arith.constant 0 : index
    %c0_16 = arith.constant 0 : index
    %19 = vector.load %arg7[%c0_15, %c0_16] : memref<1x896xf32, #tpu.memory_space<vmem>>, vector<1x896xf32>
    %20 = vector.broadcast %19 : vector<1x896xf32> to vector<128x896xf32>
    %21 = arith.addf %18, %20 : vector<128x896xf32>
    %22 = math.tanh %21 : vector<128x896xf32>
    %c0_17 = arith.constant 0 : index
    %c0_18 = arith.constant 0 : index
    %23 = vector.load %arg8[%c0_17, %c0_18] : memref<128x896xf32, #tpu.memory_space<vmem>>, vector<128x896xf32>
    tpu.vector_store %arg8[%c0_17, %c0_18], %22 {strides = array<i32>} : memref<128x896xf32, #tpu.memory_space<vmem>>, vector<128x896xf32>,
    return
  }
  func.func @transform_0(%arg0: i32) -> (i32, i32) {
    %c0_i32 = arith.constant 0 : i32
    %c0_i32_0 = arith.constant 0 : i32
    return %arg0, %c0_i32 : i32, i32
  }
  func.func @transform_1(%arg0: i32) -> (i32, i32) {
    %c0_i32 = arith.constant 0 : i32
    %c0_i32_0 = arith.constant 0 : i32
    %c0_i32_1 = arith.constant 0 : i32
    return %c0_i32, %c0_i32_0 : i32, i32
  }
  func.func @transform_2(%arg0: i32) -> (i32, i32) {
    %c0_i32 = arith.constant 0 : i32
    %c0_i32_0 = arith.constant 0 : i32
    %c0_i32_1 = arith.constant 0 : i32
    return %c0_i32, %c0_i32_0 : i32, i32
  }
  func.func @transform_3(%arg0: i32) -> (i32, i32) {
    %c0_i32 = arith.constant 0 : i32
    %c0_i32_0 = arith.constant 0 : i32
    %c0_i32_1 = arith.constant 0 : i32
    return %c0_i32, %c0_i32_0 : i32, i32
  }
  func.func @transform_4(%arg0: i32) -> (i32, i32) {
    %c0_i32 = arith.constant 0 : i32
    %c0_i32_0 = arith.constant 0 : i32
    %c0_i32_1 = arith.constant 0 : i32
    return %c0_i32, %c0_i32_0 : i32, i32
  }
  func.func @transform_5(%arg0: i32) -> (i32, i32) {
    %c0_i32 = arith.constant 0 : i32
    %c0_i32_0 = arith.constant 0 : i32
    %c0_i32_1 = arith.constant 0 : i32
    return %c0_i32, %c0_i32_0 : i32, i32
  }
  func.func @transform_6(%arg0: i32) -> (i32, i32) {
    %c0_i32 = arith.constant 0 : i32
    %c0_i32_0 = arith.constant 0 : i32
    %c0_i32_1 = arith.constant 0 : i32
    return %c0_i32, %c0_i32_0 : i32, i32
  }
  func.func @transform_7(%arg0: i32) -> (i32, i32) {
    %c0_i32 = arith.constant 0 : i32
    %c0_i32_0 = arith.constant 0 : i32
    return %arg0, %c0_i32 : i32, i32
  }
}

</mosaic_0001>

<llo_original>
// kernel: vanilla_g_forward.1
$region0: #{vanilla_g_forward.1}
  #allocation0 [shape = 'u32[]', space=smem, size = 0x4, offset = 0x4, fixed_abs, tag = 'smem constant byte address 0x4 - core index']
  #allocation1 [shape = 'u32[144,128]{1,0:T(1,128)}', space=vmem, size = 0x12000, scoped, tag = 'internal scratch']
  %s0 = inlined_call_operand.vmem [shape: bf16[128,128], index: 0, kind: input, shape index: {}]
  %s1 = inlined_call_operand.vmem [shape: bf16[128,256], index: 1, kind: input, shape index: {}]
  %s2 = inlined_call_operand.vmem [shape: f32[1,256], index: 2, kind: input, shape index: {}]
  %s3 = inlined_call_operand.vmem [shape: bf16[256,256], index: 3, kind: input, shape index: {}]
  %s4 = inlined_call_operand.vmem [shape: f32[1,256], index: 4, kind: input, shape index: {}]
  %s5 = inlined_call_operand.vmem [shape: bf16[256,896], index: 5, kind: input, shape index: {}]
  %s6 = inlined_call_operand.vmem [shape: f32[1,896], index: 6, kind: input, shape index: {}]
  %s7 = inlined_call_operand.vmem [shape: f32[128,896], index: 7, kind: output, shape index: {}]
  %s8 = sld [smem:[#allocation0]]
  $region38: #{vanilla_g_forward.1} parent=0
    _
  %s10 = ssub.s32 1, %s8
  %s11 = scalar_select 0, %s10, %s8
  // Predicated region
  $region2: #{vanilla_g_forward.1} parent=0 // pred_check
    _
  $region3: #{vanilla_g_forward.1} parent=0 // pred_check_branch
    %13 = sbr.rel (0) target = $region5
  $region4: #{vanilla_g_forward.1} parent=0 // pred_region
    _
  $region5: #{vanilla_g_forward.1} parent=0 // pred_fallthru
    _
  // Predicated region
  $region6: #{vanilla_g_forward.1} parent=0 // pred_check
    _
  $region7: #{vanilla_g_forward.1} parent=0 // pred_check_branch
    %15 = sbr.rel (0) target = $region9
  $region8: #{vanilla_g_forward.1} parent=0 // pred_region
    _
  $region9: #{vanilla_g_forward.1} parent=0 // pred_fallthru
    _
  // Predicated region
  $region10: #{vanilla_g_forward.1} parent=0 // pred_check
    _
  $region11: #{vanilla_g_forward.1} parent=0 // pred_check_branch
    %17 = sbr.rel (0) target = $region13
  $region12: #{vanilla_g_forward.1} parent=0 // pred_region
    _
  $region13: #{vanilla_g_forward.1} parent=0 // pred_fallthru
    _
  // Predicated region
  $region14: #{vanilla_g_forward.1} parent=0 // pred_check
    _
  $region15: #{vanilla_g_forward.1} parent=0 // pred_check_branch
    %19 = sbr.rel (0) target = $region17
  $region16: #{vanilla_g_forward.1} parent=0 // pred_region
    _
  $region17: #{vanilla_g_forward.1} parent=0 // pred_fallthru
    _
  // Predicated region
  $region18: #{vanilla_g_forward.1} parent=0 // pred_check
    _
  $region19: #{vanilla_g_forward.1} parent=0 // pred_check_branch
    %21 = sbr.rel (0) target = $region21
  $region20: #{vanilla_g_forward.1} parent=0 // pred_region
    _
  $region21: #{vanilla_g_forward.1} parent=0 // pred_fallthru
    _
  // Predicated region
  $region22: #{vanilla_g_forward.1} parent=0 // pred_check
    _
  $region23: #{vanilla_g_forward.1} parent=0 // pred_check_branch
    %23 = sbr.rel (0) target = $region25
  $region24: #{vanilla_g_forward.1} parent=0 // pred_region
    _
  $region25: #{vanilla_g_forward.1} parent=0 // pred_fallthru
    _
  // Predicated region
  $region26: #{vanilla_g_forward.1} parent=0 // pred_check
    _
  $region27: #{vanilla_g_forward.1} parent=0 // pred_check_branch
    %25 = sbr.rel (0) target = $region29
  $region28: #{vanilla_g_forward.1} parent=0 // pred_region
    _
  $region29: #{vanilla_g_forward.1} parent=0 // pred_fallthru
    _
  %v27 = vld [vmem:[%s0] sm:$0xf]
  %v28 = vld [vmem:[%s0 + $0x4] sm:$0xf]
  %v29 = vld [vmem:[%s0 + $0x8] sm:$0xf]
  %v30 = vld [vmem:[%s0 + $0xc] sm:$0xf]
  %v31 = vld [vmem:[%s0 + $0x10] sm:$0xf]
  %v32 = vld [vmem:[%s0 + $0x14] sm:$0xf]
  %v33 = vld [vmem:[%s0 + $0x18] sm:$0xf]
  %v34 = vld [vmem:[%s0 + $0x1c] sm:$0xf]
  %v35 = vld [vmem:[%s0 + $0x20] sm:$0xf]
  %v36 = vld [vmem:[%s0 + $0x24] sm:$0xf]
  %v37 = vld [vmem:[%s0 + $0x28] sm:$0xf]
  %v38 = vld [vmem:[%s0 + $0x2c] sm:$0xf]
  %v39 = vld [vmem:[%s0 + $0x30] sm:$0xf]
  %v40 = vld [vmem:[%s0 + $0x34] sm:$0xf]
  %v41 = vld [vmem:[%s0 + $0x38] sm:$0xf]
  %v42 = vld [vmem:[%s0 + $0x3c] sm:$0xf]
  %v43 = vld [vmem:[%s1] sm:$0xff]
  %v44 = vld [vmem:[%s1 + $0x8] sm:$0xff]
  %v45 = vld [vmem:[%s1 + $0x10] sm:$0xff]
  %v46 = vld [vmem:[%s1 + $0x18] sm:$0xff]
  %v47 = vld [vmem:[%s1 + $0x20] sm:$0xff]
  %v48 = vld [vmem:[%s1 + $0x28] sm:$0xff]
  %v49 = vld [vmem:[%s1 + $0x30] sm:$0xff]
  %v50 = vld [vmem:[%s1 + $0x38] sm:$0xff]
  %v51 = vld [vmem:[%s1 + $0x40] sm:$0xff]
  %v52 = vld [vmem:[%s1 + $0x48] sm:$0xff]
  %v53 = vld [vmem:[%s1 + $0x50] sm:$0xff]
  %v54 = vld [vmem:[%s1 + $0x58] sm:$0xff]
  %v55 = vld [vmem:[%s1 + $0x60] sm:$0xff]
  %v56 = vld [vmem:[%s1 + $0x68] sm:$0xff]
  %v57 = vld [vmem:[%s1 + $0x70] sm:$0xff]
  %v58 = vld [vmem:[%s1 + $0x78] sm:$0xff]
  %v59 = vld [vmem:[%s2] sm:$0x3]
  %v61 = vlaneseq
  %v62 = vshrl.u32 %v61, 7
  %v63 = vsub.s32 0, %v62
  %v64 = vrot.slane %v59, %v63
  %v65 = vlaneseq
  %v66 = vshrl.u32 %v65, 7
  %v67 = vsub.s32 1, %v66
  %v68 = vrot.slane %v59, %v67
  %v87 = vunpack.c.l.b16 %v27
  %v88 = vunpack.c.l.b16 %v28
  %v89 = vunpack.c.l.b16 %v29
  %v90 = vunpack.c.l.b16 %v30
  %v91 = vunpack.c.l.b16 %v31
  %v92 = vunpack.c.l.b16 %v32
  %v93 = vunpack.c.l.b16 %v33
  %v94 = vunpack.c.l.b16 %v34
  %v95 = vunpack.c.l.b16 %v35
  %v96 = vunpack.c.l.b16 %v36
  %v97 = vunpack.c.l.b16 %v37
  %v98 = vunpack.c.l.b16 %v38
  %v99 = vunpack.c.l.b16 %v39
  %v100 = vunpack.c.l.b16 %v40
  %v101 = vunpack.c.l.b16 %v41
  %v102 = vunpack.c.l.b16 %v42
  %v103 = vpack.c.b16 %v88, %v87
  %v104 = vpack.c.b16 %v90, %v89
  %v105 = vpack.c.b16 %v92, %v91
  %v106 = vpack.c.b16 %v94, %v93
  %v107 = vpack.c.b16 %v96, %v95
  %v108 = vpack.c.b16 %v98, %v97
  %v109 = vpack.c.b16 %v100, %v99
  %v110 = vpack.c.b16 %v102, %v101
  %v135 = vunpack.c.l.b16 %v43
  %v136 = vunpack.c.h.b16 %v43
  %v137 = vunpack.c.l.b16 %v44
  %v138 = vunpack.c.h.b16 %v44
  %v139 = vunpack.c.l.b16 %v45
  %v140 = vunpack.c.h.b16 %v45
  %v141 = vunpack.c.l.b16 %v46
  %v142 = vunpack.c.h.b16 %v46
  %v143 = vunpack.c.l.b16 %v47
  %v144 = vunpack.c.h.b16 %v47
  %v145 = vunpack.c.l.b16 %v48
  %v146 = vunpack.c.h.b16 %v48
  %v147 = vunpack.c.l.b16 %v49
  %v148 = vunpack.c.h.b16 %v49
  %v149 = vunpack.c.l.b16 %v50
  %v150 = vunpack.c.h.b16 %v50
  %v151 = vunpack.c.l.b16 %v51
  %v152 = vunpack.c.h.b16 %v51
  %v153 = vunpack.c.l.b16 %v52
  %v154 = vunpack.c.h.b16 %v52
  %v155 = vunpack.c.l.b16 %v53
  %v156 = vunpack.c.h.b16 %v53
  %v157 = vunpack.c.l.b16 %v54
  %v158 = vunpack.c.h.b16 %v54
  %v159 = vunpack.c.l.b16 %v55
  %v160 = vunpack.c.h.b16 %v55
  %v161 = vunpack.c.l.b16 %v56
  %v162 = vunpack.c.h.b16 %v56
  %v163 = vunpack.c.l.b16 %v57
  %v164 = vunpack.c.h.b16 %v57
  %v165 = vunpack.c.l.b16 %v58
  %v166 = vunpack.c.h.b16 %v58
  %v167 = vpack.c.b16 %v137, %v135
  %v168 = vpack.c.b16 %v138, %v136
  %v169 = vpack.c.b16 %v141, %v139
  %v170 = vpack.c.b16 %v142, %v140
  %v171 = vpack.c.b16 %v145, %v143
  %v172 = vpack.c.b16 %v146, %v144
  %v173 = vpack.c.b16 %v149, %v147
  %v174 = vpack.c.b16 %v150, %v148
  %v175 = vpack.c.b16 %v153, %v151
  %v176 = vpack.c.b16 %v154, %v152
  %v177 = vpack.c.b16 %v157, %v155
  %v178 = vpack.c.b16 %v158, %v156
  %v179 = vpack.c.b16 %v161, %v159
  %v180 = vpack.c.b16 %v162, %v160
  %v181 = vpack.c.b16 %v165, %v163
  %v182 = vpack.c.b16 %v166, %v164
  %199 = vmatprep.subr.bf16.mxu0 %v168
  %200 = vmatpush1.bf16.msra.mxu0 %v167
  %201 = vmatprep.subr.bf16.mxu0 %v170
  %202 = vmatpush1.bf16.msra.mxu0 %v169
  %203 = vmatprep.subr.bf16.mxu0 %v172
  %204 = vmatpush1.bf16.msra.mxu0 %v171
  %205 = vmatprep.subr.bf16.mxu0 %v174
  %206 = vmatpush1.bf16.msra.mxu0 %v173
  %207 = vmatprep.subr.bf16.mxu0 %v176
  %208 = vmatpush1.bf16.msra.mxu0 %v175
  %209 = vmatprep.subr.bf16.mxu0 %v178
  %210 = vmatpush1.bf16.msra.mxu0 %v177
  %211 = vmatprep.subr.bf16.mxu0 %v180
  %212 = vmatpush1.bf16.msra.mxu0 %v179
  %213 = vmatprep.subr.bf16.mxu0 %v182
  %214 = vmatpush1.bf16.msra.mxu0 %v181
  %215 = vmatprep.subr.bf16.mxu0 0
  %216 = vmatpush1.bf16.msra.mxu0 0
  %217 = vmatprep.subr.bf16.mxu0 0
  %218 = vmatpush1.bf16.msra.mxu0 0
  %219 = vmatprep.subr.bf16.mxu0 0
  %220 = vmatpush1.bf16.msra.mxu0 0
  %221 = vmatprep.subr.bf16.mxu0 0
  %222 = vmatpush1.bf16.msra.mxu0 0
  %223 = vmatprep.subr.bf16.mxu0 0
  %224 = vmatpush1.bf16.msra.mxu0 0
  %225 = vmatprep.subr.bf16.mxu0 0
  %226 = vmatpush1.bf16.msra.mxu0 0
  %227 = vmatprep.subr.bf16.mxu0 0
  %228 = vmatpush1.bf16.msra.mxu0 0
  %229 = vmatprep.subr.bf16.mxu0 0
  %230 = vmatpush1.bf16.msra.mxu0 0
  %231 = vmatprep.mubr.bf16.mxu0 0
  %232 = vmatmul.mubr.bf16.gmra.mrb[0].mxu0 %v103
  %v233 = vpop.f32.mrb[0].mxu0
  %v234 = vadd.f32 %v64, %v233
  %v235 = vpop.f32.mrb[0].mxu0
  %v236 = vadd.f32 %v68, %v235
  %v237 = vpop.f32.mrb[0].mxu0
  %v238 = vadd.f32 %v64, %v237
  %v239 = vpop.f32.mrb[0].mxu0
  %v240 = vadd.f32 %v68, %v239
  %241 = vmatprep.mubr.bf16.mxu0 0
  %242 = vmatmul.mubr.bf16.gmra.mrb[0].mxu0 %v104
  %v243 = vpop.f32.mrb[0].mxu0
  %v244 = vadd.f32 %v64, %v243
  %v245 = vpop.f32.mrb[0].mxu0
  %v246 = vadd.f32 %v68, %v245
  %v247 = vpop.f32.mrb[0].mxu0
  %v248 = vadd.f32 %v64, %v247
  %v249 = vpop.f32.mrb[0].mxu0
  %v250 = vadd.f32 %v68, %v249
  %251 = vmatprep.mubr.bf16.mxu0 0
  %252 = vmatmul.mubr.bf16.gmra.mrb[0].mxu0 %v105
  %v253 = vpop.f32.mrb[0].mxu0
  %v254 = vadd.f32 %v64, %v253
  %v255 = vpop.f32.mrb[0].mxu0
  %v256 = vadd.f32 %v68, %v255
  %v257 = vpop.f32.mrb[0].mxu0
  %v258 = vadd.f32 %v64, %v257
  %v259 = vpop.f32.mrb[0].mxu0
  %v260 = vadd.f32 %v68, %v259
  %261 = vmatprep.mubr.bf16.mxu0 0
  %262 = vmatmul.mubr.bf16.gmra.mrb[0].mxu0 %v106
  %v263 = vpop.f32.mrb[0].mxu0
  %v264 = vadd.f32 %v64, %v263
  %v265 = vpop.f32.mrb[0].mxu0
  %v266 = vadd.f32 %v68, %v265
  %v267 = vpop.f32.mrb[0].mxu0
  %v268 = vadd.f32 %v64, %v267
  %v269 = vpop.f32.mrb[0].mxu0
  %v270 = vadd.f32 %v68, %v269
  %271 = vmatprep.mubr.bf16.mxu0 0
  %272 = vmatmul.mubr.bf16.gmra.mrb[0].mxu0 %v107
  %v273 = vpop.f32.mrb[0].mxu0
  %v274 = vadd.f32 %v64, %v273
  %v275 = vpop.f32.mrb[0].mxu0
  %v276 = vadd.f32 %v68, %v275
  %v277 = vpop.f32.mrb[0].mxu0
  %v278 = vadd.f32 %v64, %v277
  %v279 = vpop.f32.mrb[0].mxu0
  %v280 = vadd.f32 %v68, %v279
  %281 = vmatprep.mubr.bf16.mxu0 0
  %282 = vmatmul.mubr.bf16.gmra.mrb[0].mxu0 %v108
  %v283 = vpop.f32.mrb[0].mxu0
  %v284 = vadd.f32 %v64, %v283
  %v285 = vpop.f32.mrb[0].mxu0
  %v286 = vadd.f32 %v68, %v285
  %v287 = vpop.f32.mrb[0].mxu0
  %v288 = vadd.f32 %v64, %v287
  %v289 = vpop.f32.mrb[0].mxu0
  %v290 = vadd.f32 %v68, %v289
  %291 = vmatprep.mubr.bf16.mxu0 0
  %292 = vmatmul.mubr.bf16.gmra.mrb[0].mxu0 %v109
  %v293 = vpop.f32.mrb[0].mxu0
  %v294 = vadd.f32 %v64, %v293
  %v295 = vpop.f32.mrb[0].mxu0
  %v296 = vadd.f32 %v68, %v295
  %v297 = vpop.f32.mrb[0].mxu0
  %v298 = vadd.f32 %v64, %v297
  %v299 = vpop.f32.mrb[0].mxu0
  %v300 = vadd.f32 %v68, %v299
  %301 = vmatprep.mubr.bf16.mxu0 0
  %302 = vmatmul.mubr.bf16.gmra.mrb[0].mxu0 %v110
  %v303 = vpop.f32.mrb[0].mxu0
  %v304 = vadd.f32 %v64, %v303
  %v305 = vpop.f32.mrb[0].mxu0
  %v306 = vadd.f32 %v68, %v305
  %v307 = vpop.f32.mrb[0].mxu0
  %v308 = vadd.f32 %v64, %v307
  %v309 = vpop.f32.mrb[0].mxu0
  %v310 = vadd.f32 %v68, %v309
  %311 = vdwg.mxu0
  %v312 = vmax.f32 %v234, 0.0
  %v313 = vmax.f32 %v236, 0.0
  %v314 = vmax.f32 %v238, 0.0
  %v315 = vmax.f32 %v240, 0.0
  %v316 = vmax.f32 %v244, 0.0
  %v317 = vmax.f32 %v246, 0.0
  %v318 = vmax.f32 %v248, 0.0
  %v319 = vmax.f32 %v250, 0.0
  %v320 = vmax.f32 %v254, 0.0
  %v321 = vmax.f32 %v256, 0.0
  %v322 = vmax.f32 %v258, 0.0
  %v323 = vmax.f32 %v260, 0.0
  %v324 = vmax.f32 %v264, 0.0
  %v325 = vmax.f32 %v266, 0.0
  %v326 = vmax.f32 %v268, 0.0
  %v327 = vmax.f32 %v270, 0.0
  %v328 = vmax.f32 %v274, 0.0
  %v329 = vmax.f32 %v276, 0.0
  %v330 = vmax.f32 %v278, 0.0
  %v331 = vmax.f32 %v280, 0.0
  %v332 = vmax.f32 %v284, 0.0
  %v333 = vmax.f32 %v286, 0.0
  %v334 = vmax.f32 %v288, 0.0
  %v335 = vmax.f32 %v290, 0.0
  %v336 = vmax.f32 %v294, 0.0
  %v337 = vmax.f32 %v296, 0.0
  %v338 = vmax.f32 %v298, 0.0
  %v339 = vmax.f32 %v300, 0.0
  %v340 = vmax.f32 %v304, 0.0
  %v341 = vmax.f32 %v306, 0.0
  %v342 = vmax.f32 %v308, 0.0
  %v343 = vmax.f32 %v310, 0.0
  %v344 = vpack.c.bf16 %v314, %v312
  %v345 = vpack.c.bf16 %v315, %v313
  %v346 = vpack.c.bf16 %v318, %v316
  %v347 = vpack.c.bf16 %v319, %v317
  %v348 = vpack.c.bf16 %v322, %v320
  %v349 = vpack.c.bf16 %v323, %v321
  %v350 = vpack.c.bf16 %v326, %v324
  %v351 = vpack.c.bf16 %v327, %v325
  %v352 = vpack.c.bf16 %v330, %v328
  %v353 = vpack.c.bf16 %v331, %v329
  %v354 = vpack.c.bf16 %v334, %v332
  %v355 = vpack.c.bf16 %v335, %v333
  %v356 = vpack.c.bf16 %v338, %v336
  %v357 = vpack.c.bf16 %v339, %v337
  %v358 = vpack.c.bf16 %v342, %v340
  %v359 = vpack.c.bf16 %v343, %v341
  %v360 = vld [vmem:[%s3] sm:$0xff]
  %v361 = vld [vmem:[%s3 + $0x8] sm:$0xff]
  %v362 = vld [vmem:[%s3 + $0x10] sm:$0xff]
  %v363 = vld [vmem:[%s3 + $0x18] sm:$0xff]
  %v364 = vld [vmem:[%s3 + $0x20] sm:$0xff]
  %v365 = vld [vmem:[%s3 + $0x28] sm:$0xff]
  %v366 = vld [vmem:[%s3 + $0x30] sm:$0xff]
  %v367 = vld [vmem:[%s3 + $0x38] sm:$0xff]
  %v368 = vld [vmem:[%s3 + $0x40] sm:$0xff]
  %v369 = vld [vmem:[%s3 + $0x48] sm:$0xff]
  %v370 = vld [vmem:[%s3 + $0x50] sm:$0xff]
  %v371 = vld [vmem:[%s3 + $0x58] sm:$0xff]
  %v372 = vld [vmem:[%s3 + $0x60] sm:$0xff]
  %v373 = vld [vmem:[%s3 + $0x68] sm:$0xff]
  %v374 = vld [vmem:[%s3 + $0x70] sm:$0xff]
  %v375 = vld [vmem:[%s3 + $0x78] sm:$0xff]
  %v376 = vld [vmem:[%s3 + $0x80] sm:$0xff]
  %v377 = vld [vmem:[%s3 + $0x88] sm:$0xff]
  %v378 = vld [vmem:[%s3 + $0x90] sm:$0xff]
  %v379 = vld [vmem:[%s3 + $0x98] sm:$0xff]
  %v380 = vld [vmem:[%s3 + $0xa0] sm:$0xff]
  %v381 = vld [vmem:[%s3 + $0xa8] sm:$0xff]
  %v382 = vld [vmem:[%s3 + $0xb0] sm:$0xff]
  %v383 = vld [vmem:[%s3 + $0xb8] sm:$0xff]
  %v384 = vld [vmem:[%s3 + $0xc0] sm:$0xff]
  %v385 = vld [vmem:[%s3 + $0xc8] sm:$0xff]
  %v386 = vld [vmem:[%s3 + $0xd0] sm:$0xff]
  %v387 = vld [vmem:[%s3 + $0xd8] sm:$0xff]
  %v388 = vld [vmem:[%s3 + $0xe0] sm:$0xff]
  %v389 = vld [vmem:[%s3 + $0xe8] sm:$0xff]
  %v390 = vld [vmem:[%s3 + $0xf0] sm:$0xff]
  %v391 = vld [vmem:[%s3 + $0xf8] sm:$0xff]
  %v392 = vld [vmem:[%s4] sm:$0x3]
  %v394 = vlaneseq
  %v395 = vshrl.u32 %v394, 7
  %v396 = vsub.s32 0, %v395
  %v397 = vrot.slane %v392, %v396
  %v398 = vlaneseq
  %v399 = vshrl.u32 %v398, 7
  %v400 = vsub.s32 1, %v399
  %v401 = vrot.slane %v392, %v400
  %v436 = vunpack.c.l.b16 %v360
  %v437 = vunpack.c.h.b16 %v360
  %v438 = vunpack.c.l.b16 %v361
  %v439 = vunpack.c.h.b16 %v361
  %v440 = vunpack.c.l.b16 %v362
  %v441 = vunpack.c.h.b16 %v362
  %v442 = vunpack.c.l.b16 %v363
  %v443 = vunpack.c.h.b16 %v363
  %v444 = vunpack.c.l.b16 %v364
  %v445 = vunpack.c.h.b16 %v364
  %v446 = vunpack.c.l.b16 %v365
  %v447 = vunpack.c.h.b16 %v365
  %v448 = vunpack.c.l.b16 %v366
  %v449 = vunpack.c.h.b16 %v366
  %v450 = vunpack.c.l.b16 %v367
  %v451 = vunpack.c.h.b16 %v367
  %v452 = vunpack.c.l.b16 %v368
  %v453 = vunpack.c.h.b16 %v368
  %v454 = vunpack.c.l.b16 %v369
  %v455 = vunpack.c.h.b16 %v369
  %v456 = vunpack.c.l.b16 %v370
  %v457 = vunpack.c.h.b16 %v370
  %v458 = vunpack.c.l.b16 %v371
  %v459 = vunpack.c.h.b16 %v371
  %v460 = vunpack.c.l.b16 %v372
  %v461 = vunpack.c.h.b16 %v372
  %v462 = vunpack.c.l.b16 %v373
  %v463 = vunpack.c.h.b16 %v373
  %v464 = vunpack.c.l.b16 %v374
  %v465 = vunpack.c.h.b16 %v374
  %v466 = vunpack.c.l.b16 %v375
  %v467 = vunpack.c.h.b16 %v375
  %v468 = vunpack.c.l.b16 %v376
  %v469 = vunpack.c.h.b16 %v376
  %v470 = vunpack.c.l.b16 %v377
  %v471 = vunpack.c.h.b16 %v377
  %v472 = vunpack.c.l.b16 %v378
  %v473 = vunpack.c.h.b16 %v378
  %v474 = vunpack.c.l.b16 %v379
  %v475 = vunpack.c.h.b16 %v379
  %v476 = vunpack.c.l.b16 %v380
  %v477 = vunpack.c.h.b16 %v380
  %v478 = vunpack.c.l.b16 %v381
  %v479 = vunpack.c.h.b16 %v381
  %v480 = vunpack.c.l.b16 %v382
  %v481 = vunpack.c.h.b16 %v382
  %v482 = vunpack.c.l.b16 %v383
  %v483 = vunpack.c.h.b16 %v383
  %v484 = vunpack.c.l.b16 %v384
  %v485 = vunpack.c.h.b16 %v384
  %v486 = vunpack.c.l.b16 %v385
  %v487 = vunpack.c.h.b16 %v385
  %v488 = vunpack.c.l.b16 %v386
  %v489 = vunpack.c.h.b16 %v386
  %v490 = vunpack.c.l.b16 %v387
  %v491 = vunpack.c.h.b16 %v387
  %v492 = vunpack.c.l.b16 %v388
  %v493 = vunpack.c.h.b16 %v388
  %v494 = vunpack.c.l.b16 %v389
  %v495 = vunpack.c.h.b16 %v389
  %v496 = vunpack.c.l.b16 %v390
  %v497 = vunpack.c.h.b16 %v390
  %v498 = vunpack.c.l.b16 %v391
  %v499 = vunpack.c.h.b16 %v391
  %v500 = vpack.c.b16 %v438, %v436
  %v501 = vpack.c.b16 %v439, %v437
  %v502 = vpack.c.b16 %v442, %v440
  %v503 = vpack.c.b16 %v443, %v441
  %v504 = vpack.c.b16 %v446, %v444
  %v505 = vpack.c.b16 %v447, %v445
  %v506 = vpack.c.b16 %v450, %v448
  %v507 = vpack.c.b16 %v451, %v449
  %v508 = vpack.c.b16 %v454, %v452
  %v509 = vpack.c.b16 %v455, %v453
  %v510 = vpack.c.b16 %v458, %v456
  %v511 = vpack.c.b16 %v459, %v457
  %v512 = vpack.c.b16 %v462, %v460
  %v513 = vpack.c.b16 %v463, %v461
  %v514 = vpack.c.b16 %v466, %v464
  %v515 = vpack.c.b16 %v467, %v465
  %v516 = vpack.c.b16 %v470, %v468
  %v517 = vpack.c.b16 %v471, %v469
  %v518 = vpack.c.b16 %v474, %v472
  %v519 = vpack.c.b16 %v475, %v473
  %v520 = vpack.c.b16 %v478, %v476
  %v521 = vpack.c.b16 %v479, %v477
  %v522 = vpack.c.b16 %v482, %v480
  %v523 = vpack.c.b16 %v483, %v481
  %v524 = vpack.c.b16 %v486, %v484
  %v525 = vpack.c.b16 %v487, %v485
  %v526 = vpack.c.b16 %v490, %v488
  %v527 = vpack.c.b16 %v491, %v489
  %v528 = vpack.c.b16 %v494, %v492
  %v529 = vpack.c.b16 %v495, %v493
  %v530 = vpack.c.b16 %v498, %v496
  %v531 = vpack.c.b16 %v499, %v497
  %564 = vmatprep.subr.bf16.mxu0 %v501
  %565 = vmatpush1.bf16.msra.mxu0 %v500
  %566 = vmatprep.subr.bf16.mxu0 %v503
  %567 = vmatpush1.bf16.msra.mxu0 %v502
  %568 = vmatprep.subr.bf16.mxu0 %v505
  %569 = vmatpush1.bf16.msra.mxu0 %v504
  %570 = vmatprep.subr.bf16.mxu0 %v507
  %571 = vmatpush1.bf16.msra.mxu0 %v506
  %572 = vmatprep.subr.bf16.mxu0 %v509
  %573 = vmatpush1.bf16.msra.mxu0 %v508
  %574 = vmatprep.subr.bf16.mxu0 %v511
  %575 = vmatpush1.bf16.msra.mxu0 %v510
  %576 = vmatprep.subr.bf16.mxu0 %v513
  %577 = vmatpush1.bf16.msra.mxu0 %v512
  %578 = vmatprep.subr.bf16.mxu0 %v515
  %579 = vmatpush1.bf16.msra.mxu0 %v514
  %580 = vmatprep.subr.bf16.mxu0 %v517
  %581 = vmatpush1.bf16.msra.mxu0 %v516
  %582 = vmatprep.subr.bf16.mxu0 %v519
  %583 = vmatpush1.bf16.msra.mxu0 %v518
  %584 = vmatprep.subr.bf16.mxu0 %v521
  %585 = vmatpush1.bf16.msra.mxu0 %v520
  %586 = vmatprep.subr.bf16.mxu0 %v523
  %587 = vmatpush1.bf16.msra.mxu0 %v522
  %588 = vmatprep.subr.bf16.mxu0 %v525
  %589 = vmatpush1.bf16.msra.mxu0 %v524
  %590 = vmatprep.subr.bf16.mxu0 %v527
  %591 = vmatpush1.bf16.msra.mxu0 %v526
  %592 = vmatprep.subr.bf16.mxu0 %v529
  %593 = vmatpush1.bf16.msra.mxu0 %v528
  %594 = vmatprep.subr.bf16.mxu0 %v531
  %595 = vmatpush1.bf16.msra.mxu0 %v530
  %596 = vmatprep.mubr.bf16.mxu0 %v345
  %597 = vmatmul.mubr.bf16.gmra.mrb[0].mxu0 %v344
  %v598 = vpop.f32.mrb[0].mxu0
  %v599 = vadd.f32 %v397, %v598
  %v600 = vpop.f32.mrb[0].mxu0
  %v601 = vadd.f32 %v401, %v600
  %v602 = vpop.f32.mrb[0].mxu0
  %v603 = vadd.f32 %v397, %v602
  %v604 = vpop.f32.mrb[0].mxu0
  %v605 = vadd.f32 %v401, %v604
  %606 = vmatprep.mubr.bf16.mxu0 %v347
  %607 = vmatmul.mubr.bf16.gmra.mrb[0].mxu0 %v346
  %v608 = vpop.f32.mrb[0].mxu0
  %v609 = vadd.f32 %v397, %v608
  %v610 = vpop.f32.mrb[0].mxu0
  %v611 = vadd.f32 %v401, %v610
  %v612 = vpop.f32.mrb[0].mxu0
  %v613 = vadd.f32 %v397, %v612
  %v614 = vpop.f32.mrb[0].mxu0
  %v615 = vadd.f32 %v401, %v614
  %616 = vmatprep.mubr.bf16.mxu0 %v349
  %617 = vmatmul.mubr.bf16.gmra.mrb[0].mxu0 %v348
  %v618 = vpop.f32.mrb[0].mxu0
  %v619 = vadd.f32 %v397, %v618
  %v620 = vpop.f32.mrb[0].mxu0
  %v621 = vadd.f32 %v401, %v620
  %v622 = vpop.f32.mrb[0].mxu0
  %v623 = vadd.f32 %v397, %v622
  %v624 = vpop.f32.mrb[0].mxu0
  %v625 = vadd.f32 %v401, %v624
  %626 = vmatprep.mubr.bf16.mxu0 %v351
  %627 = vmatmul.mubr.bf16.gmra.mrb[0].mxu0 %v350
  %v628 = vpop.f32.mrb[0].mxu0
  %v629 = vadd.f32 %v397, %v628
  %v630 = vpop.f32.mrb[0].mxu0
  %v631 = vadd.f32 %v401, %v630
  %v632 = vpop.f32.mrb[0].mxu0
  %v633 = vadd.f32 %v397, %v632
  %v634 = vpop.f32.mrb[0].mxu0
  %v635 = vadd.f32 %v401, %v634
  %636 = vmatprep.mubr.bf16.mxu0 %v353
  %637 = vmatmul.mubr.bf16.gmra.mrb[0].mxu0 %v352
  %v638 = vpop.f32.mrb[0].mxu0
  %v639 = vadd.f32 %v397, %v638
  %v640 = vpop.f32.mrb[0].mxu0
  %v641 = vadd.f32 %v401, %v640
  %v642 = vpop.f32.mrb[0].mxu0
  %v643 = vadd.f32 %v397, %v642
  %v644 = vpop.f32.mrb[0].mxu0
  %v645 = vadd.f32 %v401, %v644
  %646 = vmatprep.mubr.bf16.mxu0 %v355
  %647 = vmatmul.mubr.bf16.gmra.mrb[0].mxu0 %v354
  %v648 = vpop.f32.mrb[0].mxu0
  %v649 = vadd.f32 %v397, %v648
  %v650 = vpop.f32.mrb[0].mxu0
  %v651 = vadd.f32 %v401, %v650
  %v652 = vpop.f32.mrb[0].mxu0
  %v653 = vadd.f32 %v397, %v652
  %v654 = vpop.f32.mrb[0].mxu0
  %v655 = vadd.f32 %v401, %v654
  %656 = vmatprep.mubr.bf16.mxu0 %v357
  %657 = vmatmul.mubr.bf16.gmra.mrb[0].mxu0 %v356
  %v658 = vpop.f32.mrb[0].mxu0
  %v659 = vadd.f32 %v397, %v658
  %v660 = vpop.f32.mrb[0].mxu0
  %v661 = vadd.f32 %v401, %v660
  %v662 = vpop.f32.mrb[0].mxu0
  %v663 = vadd.f32 %v397, %v662
  %v664 = vpop.f32.mrb[0].mxu0
  %v665 = vadd.f32 %v401, %v664
  %666 = vmatprep.mubr.bf16.mxu0 %v359
  %667 = vmatmul.mubr.bf16.gmra.mrb[0].mxu0 %v358
  %v668 = vpop.f32.mrb[0].mxu0
  %v669 = vadd.f32 %v397, %v668
  %v670 = vpop.f32.mrb[0].mxu0
  %v671 = vadd.f32 %v401, %v670
  %v672 = vpop.f32.mrb[0].mxu0
  %v673 = vadd.f32 %v397, %v672
  %v674 = vpop.f32.mrb[0].mxu0
  %v675 = vadd.f32 %v401, %v674
  %676 = vdwg.mxu0
  %v677 = vmax.f32 %v599, 0.0
  %v678 = vmax.f32 %v601, 0.0
  %v679 = vmax.f32 %v603, 0.0
  %v680 = vmax.f32 %v605, 0.0
  %v681 = vmax.f32 %v609, 0.0
  %v682 = vmax.f32 %v611, 0.0
  %v683 = vmax.f32 %v613, 0.0
  %v684 = vmax.f32 %v615, 0.0
  %v685 = vmax.f32 %v619, 0.0
  %v686 = vmax.f32 %v621, 0.0
  %v687 = vmax.f32 %v623, 0.0
  %v688 = vmax.f32 %v625, 0.0
  %v689 = vmax.f32 %v629, 0.0
  %v690 = vmax.f32 %v631, 0.0
  %v691 = vmax.f32 %v633, 0.0
  %v692 = vmax.f32 %v635, 0.0
  %v693 = vmax.f32 %v639, 0.0
  %v694 = vmax.f32 %v641, 0.0
  %v695 = vmax.f32 %v643, 0.0
  %v696 = vmax.f32 %v645, 0.0
  %v697 = vmax.f32 %v649, 0.0
  %v698 = vmax.f32 %v651, 0.0
  %v699 = vmax.f32 %v653, 0.0
  %v700 = vmax.f32 %v655, 0.0
  %v701 = vmax.f32 %v659, 0.0
  %v702 = vmax.f32 %v661, 0.0
  %v703 = vmax.f32 %v663, 0.0
  %v704 = vmax.f32 %v665, 0.0
  %v705 = vmax.f32 %v669, 0.0
  %v706 = vmax.f32 %v671, 0.0
  %v707 = vmax.f32 %v673, 0.0
  %v708 = vmax.f32 %v675, 0.0
  %v709 = vpack.c.bf16 %v679, %v677
  %v710 = vpack.c.bf16 %v680, %v678
  %v711 = vpack.c.bf16 %v683, %v681
  %v712 = vpack.c.bf16 %v684, %v682
  %v713 = vpack.c.bf16 %v687, %v685
  %v714 = vpack.c.bf16 %v688, %v686
  %v715 = vpack.c.bf16 %v691, %v689
  %v716 = vpack.c.bf16 %v692, %v690
  %v717 = vpack.c.bf16 %v695, %v693
  %v718 = vpack.c.bf16 %v696, %v694
  %v719 = vpack.c.bf16 %v699, %v697
  %v720 = vpack.c.bf16 %v700, %v698
  %v721 = vpack.c.bf16 %v703, %v701
  %v722 = vpack.c.bf16 %v704, %v702
  %v723 = vpack.c.bf16 %v707, %v705
  %v724 = vpack.c.bf16 %v708, %v706
  %v725 = vld [vmem:[%s5] sm:$0xff]
  %v726 = vld [vmem:[%s5 + $0x8] sm:$0xff]
  %v727 = vld [vmem:[%s5 + $0x10] sm:$0xff]
  %v728 = vld [vmem:[%s5 + $0x18] sm:$0xf]
  %v729 = vld [vmem:[%s5 + $0x1c] sm:$0xff]
  %v730 = vld [vmem:[%s5 + $0x24] sm:$0xff]
  %v731 = vld [vmem:[%s5 + $0x2c] sm:$0xff]
  %v732 = vld [vmem:[%s5 + $0x34] sm:$0xf]
  %v733 = vld [vmem:[%s5 + $0x38] sm:$0xff]
  %v734 = vld [vmem:[%s5 + $0x40] sm:$0xff]
  %v735 = vld [vmem:[%s5 + $0x48] sm:$0xff]
  %v736 = vld [vmem:[%s5 + $0x50] sm:$0xf]
  %v737 = vld [vmem:[%s5 + $0x54] sm:$0xff]
  %v738 = vld [vmem:[%s5 + $0x5c] sm:$0xff]
  %v739 = vld [vmem:[%s5 + $0x64] sm:$0xff]
  %v740 = vld [vmem:[%s5 + $0x6c] sm:$0xf]
  %v741 = vld [vmem:[%s5 + $0x70] sm:$0xff]
  %v742 = vld [vmem:[%s5 + $0x78] sm:$0xff]
  %v743 = vld [vmem:[%s5 + $0x80] sm:$0xff]
  %v744 = vld [vmem:[%s5 + $0x88] sm:$0xf]
  %v745 = vld [vmem:[%s5 + $0x8c] sm:$0xff]
  %v746 = vld [vmem:[%s5 + $0x94] sm:$0xff]
  %v747 = vld [vmem:[%s5 + $0x9c] sm:$0xff]
  %v748 = vld [vmem:[%s5 + $0xa4] sm:$0xf]
  %v749 = vld [vmem:[%s5 + $0xa8] sm:$0xff]
  %v750 = vld [vmem:[%s5 + $0xb0] sm:$0xff]
  %v751 = vld [vmem:[%s5 + $0xb8] sm:$0xff]
  %v752 = vld [vmem:[%s5 + $0xc0] sm:$0xf]
  %v753 = vld [vmem:[%s5 + $0xc4] sm:$0xff]
  %v754 = vld [vmem:[%s5 + $0xcc] sm:$0xff]
  %v755 = vld [vmem:[%s5 + $0xd4] sm:$0xff]
  %v756 = vld [vmem:[%s5 + $0xdc] sm:$0xf]
  %v757 = vld [vmem:[%s5 + $0xe0] sm:$0xff]
  %v758 = vld [vmem:[%s5 + $0xe8] sm:$0xff]
  %v759 = vld [vmem:[%s5 + $0xf0] sm:$0xff]
  %v760 = vld [vmem:[%s5 + $0xf8] sm:$0xf]
  %v761 = vld [vmem:[%s5 + $0xfc] sm:$0xff]
  %v762 = vld [vmem:[%s5 + $0x104] sm:$0xff]
  %v763 = vld [vmem:[%s5 + $0x10c] sm:$0xff]
  %v764 = vld [vmem:[%s5 + $0x114] sm:$0xf]
  %v765 = vld [vmem:[%s5 + $0x118] sm:$0xff]
  %v766 = vld [vmem:[%s5 + $0x120] sm:$0xff]
  %v767 = vld [vmem:[%s5 + $0x128] sm:$0xff]
  %v768 = vld [vmem:[%s5 + $0x130] sm:$0xf]
  %v769 = vld [vmem:[%s5 + $0x134] sm:$0xff]
  %v770 = vld [vmem:[%s5 + $0x13c] sm:$0xff]
  %v771 = vld [vmem:[%s5 + $0x144] sm:$0xff]
  %v772 = vld [vmem:[%s5 + $0x14c] sm:$0xf]
  %v773 = vld [vmem:[%s5 + $0x150] sm:$0xff]
  %v774 = vld [vmem:[%s5 + $0x158] sm:$0xff]
  %v775 = vld [vmem:[%s5 + $0x160] sm:$0xff]
  %v776 = vld [vmem:[%s5 + $0x168] sm:$0xf]
  %v777 = vld [vmem:[%s5 + $0x16c] sm:$0xff]
  %v778 = vld [vmem:[%s5 + $0x174] sm:$0xff]
  %v779 = vld [vmem:[%s5 + $0x17c] sm:$0xff]
  %v780 = vld [vmem:[%s5 + $0x184] sm:$0xf]
  %v781 = vld [vmem:[%s5 + $0x188] sm:$0xff]
  %v782 = vld [vmem:[%s5 + $0x190] sm:$0xff]
  %v783 = vld [vmem:[%s5 + $0x198] sm:$0xff]
  %v784 = vld [vmem:[%s5 + $0x1a0] sm:$0xf]
  %v785 = vld [vmem:[%s5 + $0x1a4] sm:$0xff]
  %v786 = vld [vmem:[%s5 + $0x1ac] sm:$0xff]
  %v787 = vld [vmem:[%s5 + $0x1b4] sm:$0xff]
  %v788 = vld [vmem:[%s5 + $0x1bc] sm:$0xf]
  %v789 = vld [vmem:[%s5 + $0x1c0] sm:$0xff]
  %v790 = vld [vmem:[%s5 + $0x1c8] sm:$0xff]
  %v791 = vld [vmem:[%s5 + $0x1d0] sm:$0xff]
  %v792 = vld [vmem:[%s5 + $0x1d8] sm:$0xf]
  %v793 = vld [vmem:[%s5 + $0x1dc] sm:$0xff]
  %v794 = vld [vmem:[%s5 + $0x1e4] sm:$0xff]
  %v795 = vld [vmem:[%s5 + $0x1ec] sm:$0xff]
  %v796 = vld [vmem:[%s5 + $0x1f4] sm:$0xf]
  %v797 = vld [vmem:[%s5 + $0x1f8] sm:$0xff]
  %v798 = vld [vmem:[%s5 + $0x200] sm:$0xff]
  %v799 = vld [vmem:[%s5 + $0x208] sm:$0xff]
  %v800 = vld [vmem:[%s5 + $0x210] sm:$0xf]
  %v801 = vld [vmem:[%s5 + $0x214] sm:$0xff]
  %v802 = vld [vmem:[%s5 + $0x21c] sm:$0xff]
  %v803 = vld [vmem:[%s5 + $0x224] sm:$0xff]
  %v804 = vld [vmem:[%s5 + $0x22c] sm:$0xf]
  %v805 = vld [vmem:[%s5 + $0x230] sm:$0xff]
  %v806 = vld [vmem:[%s5 + $0x238] sm:$0xff]
  %v807 = vld [vmem:[%s5 + $0x240] sm:$0xff]
  %v808 = vld [vmem:[%s5 + $0x248] sm:$0xf]
  %v809 = vld [vmem:[%s5 + $0x24c] sm:$0xff]
  %v810 = vld [vmem:[%s5 + $0x254] sm:$0xff]
  %v811 = vld [vmem:[%s5 + $0x25c] sm:$0xff]
  %v812 = vld [vmem:[%s5 + $0x264] sm:$0xf]
  %v813 = vld [vmem:[%s5 + $0x268] sm:$0xff]
  %v814 = vld [vmem:[%s5 + $0x270] sm:$0xff]
  %v815 = vld [vmem:[%s5 + $0x278] sm:$0xff]
  %v816 = vld [vmem:[%s5 + $0x280] sm:$0xf]
  %v817 = vld [vmem:[%s5 + $0x284] sm:$0xff]
  %v818 = vld [vmem:[%s5 + $0x28c] sm:$0xff]
  %v819 = vld [vmem:[%s5 + $0x294] sm:$0xff]
  %v820 = vld [vmem:[%s5 + $0x29c] sm:$0xf]
  %v821 = vld [vmem:[%s5 + $0x2a0] sm:$0xff]
  %v822 = vld [vmem:[%s5 + $0x2a8] sm:$0xff]
  %v823 = vld [vmem:[%s5 + $0x2b0] sm:$0xff]
  %v824 = vld [vmem:[%s5 + $0x2b8] sm:$0xf]
  %v825 = vld [vmem:[%s5 + $0x2bc] sm:$0xff]
  %v826 = vld [vmem:[%s5 + $0x2c4] sm:$0xff]
  %v827 = vld [vmem:[%s5 + $0x2cc] sm:$0xff]
  %v828 = vld [vmem:[%s5 + $0x2d4] sm:$0xf]
  %v829 = vld [vmem:[%s5 + $0x2d8] sm:$0xff]
  %v830 = vld [vmem:[%s5 + $0x2e0] sm:$0xff]
  %v831 = vld [vmem:[%s5 + $0x2e8] sm:$0xff]
  %v832 = vld [vmem:[%s5 + $0x2f0] sm:$0xf]
  %v833 = vld [vmem:[%s5 + $0x2f4] sm:$0xff]
  %v834 = vld [vmem:[%s5 + $0x2fc] sm:$0xff]
  %v835 = vld [vmem:[%s5 + $0x304] sm:$0xff]
  %v836 = vld [vmem:[%s5 + $0x30c] sm:$0xf]
  %v837 = vld [vmem:[%s5 + $0x310] sm:$0xff]
  %v838 = vld [vmem:[%s5 + $0x318] sm:$0xff]
  %v839 = vld [vmem:[%s5 + $0x320] sm:$0xff]
  %v840 = vld [vmem:[%s5 + $0x328] sm:$0xf]
  %v841 = vld [vmem:[%s5 + $0x32c] sm:$0xff]
  %v842 = vld [vmem:[%s5 + $0x334] sm:$0xff]
  %v843 = vld [vmem:[%s5 + $0x33c] sm:$0xff]
  %v844 = vld [vmem:[%s5 + $0x344] sm:$0xf]
  %v845 = vld [vmem:[%s5 + $0x348] sm:$0xff]
  %v846 = vld [vmem:[%s5 + $0x350] sm:$0xff]
  %v847 = vld [vmem:[%s5 + $0x358] sm:$0xff]
  %v848 = vld [vmem:[%s5 + $0x360] sm:$0xf]
  %v849 = vld [vmem:[%s5 + $0x364] sm:$0xff]
  %v850 = vld [vmem:[%s5 + $0x36c] sm:$0xff]
  %v851 = vld [vmem:[%s5 + $0x374] sm:$0xff]
  %v852 = vld [vmem:[%s5 + $0x37c] sm:$0xf]
  %v853 = vld [vmem:[%s6] sm:$0xff]
  %v855 = vlaneseq
  %v856 = vshrl.u32 %v855, 7
  %v857 = vsub.s32 0, %v856
  %v858 = vrot.slane %v853, %v857
  %v859 = vlaneseq
  %v860 = vshrl.u32 %v859, 7
  %v861 = vsub.s32 1, %v860
  %v862 = vrot.slane %v853, %v861
  %v863 = vlaneseq
  %v864 = vshrl.u32 %v863, 7
  %v865 = vsub.s32 2, %v864
  %v866 = vrot.slane %v853, %v865
  %v867 = vlaneseq
  %v868 = vshrl.u32 %v867, 7
  %v869 = vsub.s32 3, %v868
  %v870 = vrot.slane %v853, %v869
  %v871 = vlaneseq
  %v872 = vshrl.u32 %v871, 7
  %v873 = vsub.s32 4, %v872
  %v874 = vrot.slane %v853, %v873
  %v875 = vlaneseq
  %v876 = vshrl.u32 %v875, 7
  %v877 = vsub.s32 5, %v876
  %v878 = vrot.slane %v853, %v877
  %v879 = vlaneseq
  %v880 = vshrl.u32 %v879, 7
  %v881 = vsub.s32 6, %v880
  %v882 = vrot.slane %v853, %v881
  %v1018 = vunpack.c.l.b16 %v725
  %v1019 = vunpack.c.h.b16 %v725
  %v1020 = vunpack.c.l.b16 %v726
  %v1021 = vunpack.c.h.b16 %v726
  %v1022 = vunpack.c.l.b16 %v727
  %v1023 = vunpack.c.h.b16 %v727
  %v1024 = vunpack.c.l.b16 %v728
  %v1025 = vunpack.c.l.b16 %v729
  %v1026 = vunpack.c.h.b16 %v729
  %v1027 = vunpack.c.l.b16 %v730
  %v1028 = vunpack.c.h.b16 %v730
  %v1029 = vunpack.c.l.b16 %v731
  %v1030 = vunpack.c.h.b16 %v731
  %v1031 = vunpack.c.l.b16 %v732
  %v1032 = vunpack.c.l.b16 %v733
  %v1033 = vunpack.c.h.b16 %v733
  %v1034 = vunpack.c.l.b16 %v734
  %v1035 = vunpack.c.h.b16 %v734
  %v1036 = vunpack.c.l.b16 %v735
  %v1037 = vunpack.c.h.b16 %v735
  %v1038 = vunpack.c.l.b16 %v736
  %v1039 = vunpack.c.l.b16 %v737
  %v1040 = vunpack.c.h.b16 %v737
  %v1041 = vunpack.c.l.b16 %v738
  %v1042 = vunpack.c.h.b16 %v738
  %v1043 = vunpack.c.l.b16 %v739
  %v1044 = vunpack.c.h.b16 %v739
  %v1045 = vunpack.c.l.b16 %v740
  %v1046 = vunpack.c.l.b16 %v741
  %v1047 = vunpack.c.h.b16 %v741
  %v1048 = vunpack.c.l.b16 %v742
  %v1049 = vunpack.c.h.b16 %v742
  %v1050 = vunpack.c.l.b16 %v743
  %v1051 = vunpack.c.h.b16 %v743
  %v1052 = vunpack.c.l.b16 %v744
  %v1053 = vunpack.c.l.b16 %v745
  %v1054 = vunpack.c.h.b16 %v745
  %v1055 = vunpack.c.l.b16 %v746
  %v1056 = vunpack.c.h.b16 %v746
  %v1057 = vunpack.c.l.b16 %v747
  %v1058 = vunpack.c.h.b16 %v747
  %v1059 = vunpack.c.l.b16 %v748
  %v1060 = vunpack.c.l.b16 %v749
  %v1061 = vunpack.c.h.b16 %v749
  %v1062 = vunpack.c.l.b16 %v750
  %v1063 = vunpack.c.h.b16 %v750
  %v1064 = vunpack.c.l.b16 %v751
  %v1065 = vunpack.c.h.b16 %v751
  %v1066 = vunpack.c.l.b16 %v752
  %v1067 = vunpack.c.l.b16 %v753
  %v1068 = vunpack.c.h.b16 %v753
  %v1069 = vunpack.c.l.b16 %v754
  %v1070 = vunpack.c.h.b16 %v754
  %v1071 = vunpack.c.l.b16 %v755
  %v1072 = vunpack.c.h.b16 %v755
  %v1073 = vunpack.c.l.b16 %v756
  %v1074 = vunpack.c.l.b16 %v757
  %v1075 = vunpack.c.h.b16 %v757
  %v1076 = vunpack.c.l.b16 %v758
  %v1077 = vunpack.c.h.b16 %v758
  %v1078 = vunpack.c.l.b16 %v759
  %v1079 = vunpack.c.h.b16 %v759
  %v1080 = vunpack.c.l.b16 %v760
  %v1081 = vunpack.c.l.b16 %v761
  %v1082 = vunpack.c.h.b16 %v761
  %v1083 = vunpack.c.l.b16 %v762
  %v1084 = vunpack.c.h.b16 %v762
  %v1085 = vunpack.c.l.b16 %v763
  %v1086 = vunpack.c.h.b16 %v763
  %v1087 = vunpack.c.l.b16 %v764
  %v1088 = vunpack.c.l.b16 %v765
  %v1089 = vunpack.c.h.b16 %v765
  %v1090 = vunpack.c.l.b16 %v766
  %v1091 = vunpack.c.h.b16 %v766
  %v1092 = vunpack.c.l.b16 %v767
  %v1093 = vunpack.c.h.b16 %v767
  %v1094 = vunpack.c.l.b16 %v768
  %v1095 = vunpack.c.l.b16 %v769
  %v1096 = vunpack.c.h.b16 %v769
  %v1097 = vunpack.c.l.b16 %v770
  %v1098 = vunpack.c.h.b16 %v770
  %v1099 = vunpack.c.l.b16 %v771
  %v1100 = vunpack.c.h.b16 %v771
  %v1101 = vunpack.c.l.b16 %v772
  %v1102 = vunpack.c.l.b16 %v773
  %v1103 = vunpack.c.h.b16 %v773
  %v1104 = vunpack.c.l.b16 %v774
  %v1105 = vunpack.c.h.b16 %v774
  %v1106 = vunpack.c.l.b16 %v775
  %v1107 = vunpack.c.h.b16 %v775
  %v1108 = vunpack.c.l.b16 %v776
  %v1109 = vunpack.c.l.b16 %v777
  %v1110 = vunpack.c.h.b16 %v777
  %v1111 = vunpack.c.l.b16 %v778
  %v1112 = vunpack.c.h.b16 %v778
  %v1113 = vunpack.c.l.b16 %v779
  %v1114 = vunpack.c.h.b16 %v779
  %v1115 = vunpack.c.l.b16 %v780
  %v1116 = vunpack.c.l.b16 %v781
  %v1117 = vunpack.c.h.b16 %v781
  %v1118 = vunpack.c.l.b16 %v782
  %v1119 = vunpack.c.h.b16 %v782
  %v1120 = vunpack.c.l.b16 %v783
  %v1121 = vunpack.c.h.b16 %v783
  %v1122 = vunpack.c.l.b16 %v784
  %v1123 = vunpack.c.l.b16 %v785
  %v1124 = vunpack.c.h.b16 %v785
  %v1125 = vunpack.c.l.b16 %v786
  %v1126 = vunpack.c.h.b16 %v786
  %v1127 = vunpack.c.l.b16 %v787
  %v1128 = vunpack.c.h.b16 %v787
  %v1129 = vunpack.c.l.b16 %v788
  %v1130 = vunpack.c.l.b16 %v789
  %v1131 = vunpack.c.h.b16 %v789
  %v1132 = vunpack.c.l.b16 %v790
  %v1133 = vunpack.c.h.b16 %v790
  %v1134 = vunpack.c.l.b16 %v791
  %v1135 = vunpack.c.h.b16 %v791
  %v1136 = vunpack.c.l.b16 %v792
  %v1137 = vunpack.c.l.b16 %v793
  %v1138 = vunpack.c.h.b16 %v793
  %v1139 = vunpack.c.l.b16 %v794
  %v1140 = vunpack.c.h.b16 %v794
  %v1141 = vunpack.c.l.b16 %v795
  %v1142 = vunpack.c.h.b16 %v795
  %v1143 = vunpack.c.l.b16 %v796
  %v1144 = vunpack.c.l.b16 %v797
  %v1145 = vunpack.c.h.b16 %v797
  %v1146 = vunpack.c.l.b16 %v798
  %v1147 = vunpack.c.h.b16 %v798
  %v1148 = vunpack.c.l.b16 %v799
  %v1149 = vunpack.c.h.b16 %v799
  %v1150 = vunpack.c.l.b16 %v800
  %v1151 = vunpack.c.l.b16 %v801
  %v1152 = vunpack.c.h.b16 %v801
  %v1153 = vunpack.c.l.b16 %v802
  %v1154 = vunpack.c.h.b16 %v802
  %v1155 = vunpack.c.l.b16 %v803
  %v1156 = vunpack.c.h.b16 %v803
  %v1157 = vunpack.c.l.b16 %v804
  %v1158 = vunpack.c.l.b16 %v805
  %v1159 = vunpack.c.h.b16 %v805
  %v1160 = vunpack.c.l.b16 %v806
  %v1161 = vunpack.c.h.b16 %v806
  %v1162 = vunpack.c.l.b16 %v807
  %v1163 = vunpack.c.h.b16 %v807
  %v1164 = vunpack.c.l.b16 %v808
  %v1165 = vunpack.c.l.b16 %v809
  %v1166 = vunpack.c.h.b16 %v809
  %v1167 = vunpack.c.l.b16 %v810
  %v1168 = vunpack.c.h.b16 %v810
  %v1169 = vunpack.c.l.b16 %v811
  %v1170 = vunpack.c.h.b16 %v811
  %v1171 = vunpack.c.l.b16 %v812
  %v1172 = vunpack.c.l.b16 %v813
  %v1173 = vunpack.c.h.b16 %v813
  %v1174 = vunpack.c.l.b16 %v814
  %v1175 = vunpack.c.h.b16 %v814
  %v1176 = vunpack.c.l.b16 %v815
  %v1177 = vunpack.c.h.b16 %v815
  %v1178 = vunpack.c.l.b16 %v816
  %v1179 = vunpack.c.l.b16 %v817
  %v1180 = vunpack.c.h.b16 %v817
  %v1181 = vunpack.c.l.b16 %v818
  %v1182 = vunpack.c.h.b16 %v818
  %v1183 = vunpack.c.l.b16 %v819
  %v1184 = vunpack.c.h.b16 %v819
  %v1185 = vunpack.c.l.b16 %v820
  %v1186 = vunpack.c.l.b16 %v821
  %v1187 = vunpack.c.h.b16 %v821
  %v1188 = vunpack.c.l.b16 %v822
  %v1189 = vunpack.c.h.b16 %v822
  %v1190 = vunpack.c.l.b16 %v823
  %v1191 = vunpack.c.h.b16 %v823
  %v1192 = vunpack.c.l.b16 %v824
  %v1193 = vunpack.c.l.b16 %v825
  %v1194 = vunpack.c.h.b16 %v825
  %v1195 = vunpack.c.l.b16 %v826
  %v1196 = vunpack.c.h.b16 %v826
  %v1197 = vunpack.c.l.b16 %v827
  %v1198 = vunpack.c.h.b16 %v827
  %v1199 = vunpack.c.l.b16 %v828
  %v1200 = vunpack.c.l.b16 %v829
  %v1201 = vunpack.c.h.b16 %v829
  %v1202 = vunpack.c.l.b16 %v830
  %v1203 = vunpack.c.h.b16 %v830
  %v1204 = vunpack.c.l.b16 %v831
  %v1205 = vunpack.c.h.b16 %v831
  %v1206 = vunpack.c.l.b16 %v832
  %v1207 = vunpack.c.l.b16 %v833
  %v1208 = vunpack.c.h.b16 %v833
  %v1209 = vunpack.c.l.b16 %v834
  %v1210 = vunpack.c.h.b16 %v834
  %v1211 = vunpack.c.l.b16 %v835
  %v1212 = vunpack.c.h.b16 %v835
  %v1213 = vunpack.c.l.b16 %v836
  %v1214 = vunpack.c.l.b16 %v837
  %v1215 = vunpack.c.h.b16 %v837
  %v1216 = vunpack.c.l.b16 %v838
  %v1217 = vunpack.c.h.b16 %v838
  %v1218 = vunpack.c.l.b16 %v839
  %v1219 = vunpack.c.h.b16 %v839
  %v1220 = vunpack.c.l.b16 %v840
  %v1221 = vunpack.c.l.b16 %v841
  %v1222 = vunpack.c.h.b16 %v841
  %v1223 = vunpack.c.l.b16 %v842
  %v1224 = vunpack.c.h.b16 %v842
  %v1225 = vunpack.c.l.b16 %v843
  %v1226 = vunpack.c.h.b16 %v843
  %v1227 = vunpack.c.l.b16 %v844
  %v1228 = vunpack.c.l.b16 %v845
  %v1229 = vunpack.c.h.b16 %v845
  %v1230 = vunpack.c.l.b16 %v846
  %v1231 = vunpack.c.h.b16 %v846
  %v1232 = vunpack.c.l.b16 %v847
  %v1233 = vunpack.c.h.b16 %v847
  %v1234 = vunpack.c.l.b16 %v848
  %v1235 = vunpack.c.l.b16 %v849
  %v1236 = vunpack.c.h.b16 %v849
  %v1237 = vunpack.c.l.b16 %v850
  %v1238 = vunpack.c.h.b16 %v850
  %v1239 = vunpack.c.l.b16 %v851
  %v1240 = vunpack.c.h.b16 %v851
  %v1241 = vunpack.c.l.b16 %v852
  %v1242 = vpack.c.b16 %v1025, %v1018
  %v1243 = vpack.c.b16 %v1026, %v1019
  %v1244 = vpack.c.b16 %v1027, %v1020
  %v1245 = vpack.c.b16 %v1028, %v1021
  %v1246 = vpack.c.b16 %v1029, %v1022
  %v1247 = vpack.c.b16 %v1030, %v1023
  %v1248 = vpack.c.b16 %v1031, %v1024
  %v1249 = vpack.c.b16 %v1039, %v1032
  %v1250 = vpack.c.b16 %v1040, %v1033
  %v1251 = vpack.c.b16 %v1041, %v1034
  %v1252 = vpack.c.b16 %v1042, %v1035
  %v1253 = vpack.c.b16 %v1043, %v1036
  %v1254 = vpack.c.b16 %v1044, %v1037
  %v1255 = vpack.c.b16 %v1045, %v1038
  %v1256 = vpack.c.b16 %v1053, %v1046
  %v1257 = vpack.c.b16 %v1054, %v1047
  %v1258 = vpack.c.b16 %v1055, %v1048
  %v1259 = vpack.c.b16 %v1056, %v1049
  %v1260 = vpack.c.b16 %v1057, %v1050
  %v1261 = vpack.c.b16 %v1058, %v1051
  %v1262 = vpack.c.b16 %v1059, %v1052
  %v1263 = vpack.c.b16 %v1067, %v1060
  %v1264 = vpack.c.b16 %v1068, %v1061
  %v1265 = vpack.c.b16 %v1069, %v1062
  %v1266 = vpack.c.b16 %v1070, %v1063
  %v1267 = vpack.c.b16 %v1071, %v1064
  %v1268 = vpack.c.b16 %v1072, %v1065
  %v1269 = vpack.c.b16 %v1073, %v1066
  %v1270 = vpack.c.b16 %v1081, %v1074
  %v1271 = vpack.c.b16 %v1082, %v1075
  %v1272 = vpack.c.b16 %v1083, %v1076
  %v1273 = vpack.c.b16 %v1084, %v1077
  %v1274 = vpack.c.b16 %v1085, %v1078
  %v1275 = vpack.c.b16 %v1086, %v1079
  %v1276 = vpack.c.b16 %v1087, %v1080
  %v1277 = vpack.c.b16 %v1095, %v1088
  %v1278 = vpack.c.b16 %v1096, %v1089
  %v1279 = vpack.c.b16 %v1097, %v1090
  %v1280 = vpack.c.b16 %v1098, %v1091
  %v1281 = vpack.c.b16 %v1099, %v1092
  %v1282 = vpack.c.b16 %v1100, %v1093
  %v1283 = vpack.c.b16 %v1101, %v1094
  %v1284 = vpack.c.b16 %v1109, %v1102
  %v1285 = vpack.c.b16 %v1110, %v1103
  %v1286 = vpack.c.b16 %v1111, %v1104
  %v1287 = vpack.c.b16 %v1112, %v1105
  %v1288 = vpack.c.b16 %v1113, %v1106
  %v1289 = vpack.c.b16 %v1114, %v1107
  %v1290 = vpack.c.b16 %v1115, %v1108
  %v1291 = vpack.c.b16 %v1123, %v1116
  %v1292 = vpack.c.b16 %v1124, %v1117
  %v1293 = vpack.c.b16 %v1125, %v1118
  %v1294 = vpack.c.b16 %v1126, %v1119
  %v1295 = vpack.c.b16 %v1127, %v1120
  %v1296 = vpack.c.b16 %v1128, %v1121
  %v1297 = vpack.c.b16 %v1129, %v1122
  %v1298 = vpack.c.b16 %v1137, %v1130
  %v1299 = vpack.c.b16 %v1138, %v1131
  %v1300 = vpack.c.b16 %v1139, %v1132
  %v1301 = vpack.c.b16 %v1140, %v1133
  %v1302 = vpack.c.b16 %v1141, %v1134
  %v1303 = vpack.c.b16 %v1142, %v1135
  %v1304 = vpack.c.b16 %v1143, %v1136
  %v1305 = vpack.c.b16 %v1151, %v1144
  %v1306 = vpack.c.b16 %v1152, %v1145
  %v1307 = vpack.c.b16 %v1153, %v1146
  %v1308 = vpack.c.b16 %v1154, %v1147
  %v1309 = vpack.c.b16 %v1155, %v1148
  %v1310 = vpack.c.b16 %v1156, %v1149
  %v1311 = vpack.c.b16 %v1157, %v1150
  %v1312 = vpack.c.b16 %v1165, %v1158
  %v1313 = vpack.c.b16 %v1166, %v1159
  %v1314 = vpack.c.b16 %v1167, %v1160
  %v1315 = vpack.c.b16 %v1168, %v1161
  %v1316 = vpack.c.b16 %v1169, %v1162
  %v1317 = vpack.c.b16 %v1170, %v1163
  %v1318 = vpack.c.b16 %v1171, %v1164
  %v1319 = vpack.c.b16 %v1179, %v1172
  %v1320 = vpack.c.b16 %v1180, %v1173
  %v1321 = vpack.c.b16 %v1181, %v1174
  %v1322 = vpack.c.b16 %v1182, %v1175
  %v1323 = vpack.c.b16 %v1183, %v1176
  %v1324 = vpack.c.b16 %v1184, %v1177
  %v1325 = vpack.c.b16 %v1185, %v1178
  %v1326 = vpack.c.b16 %v1193, %v1186
  %v1327 = vpack.c.b16 %v1194, %v1187
  %v1328 = vpack.c.b16 %v1195, %v1188
  %v1329 = vpack.c.b16 %v1196, %v1189
  %v1330 = vpack.c.b16 %v1197, %v1190
  %v1331 = vpack.c.b16 %v1198, %v1191
  %v1332 = vpack.c.b16 %v1199, %v1192
  %v1333 = vpack.c.b16 %v1207, %v1200
  %v1334 = vpack.c.b16 %v1208, %v1201
  %v1335 = vpack.c.b16 %v1209, %v1202
  %v1336 = vpack.c.b16 %v1210, %v1203
  %v1337 = vpack.c.b16 %v1211, %v1204
  %v1338 = vpack.c.b16 %v1212, %v1205
  %v1339 = vpack.c.b16 %v1213, %v1206
  %v1340 = vpack.c.b16 %v1221, %v1214
  %v1341 = vpack.c.b16 %v1222, %v1215
  %v1342 = vpack.c.b16 %v1223, %v1216
  %v1343 = vpack.c.b16 %v1224, %v1217
  %v1344 = vpack.c.b16 %v1225, %v1218
  %v1345 = vpack.c.b16 %v1226, %v1219
  %v1346 = vpack.c.b16 %v1227, %v1220
  %v1347 = vpack.c.b16 %v1235, %v1228
  %v1348 = vpack.c.b16 %v1236, %v1229
  %v1349 = vpack.c.b16 %v1237, %v1230
  %v1350 = vpack.c.b16 %v1238, %v1231
  %v1351 = vpack.c.b16 %v1239, %v1232
  %v1352 = vpack.c.b16 %v1240, %v1233
  %v1353 = vpack.c.b16 %v1241, %v1234
  %1466 = vmatprep.subr.bf16.mxu0 %v1243
  %1467 = vmatpush1.bf16.msra.mxu0 %v1242
  %1468 = vmatprep.subr.bf16.mxu0 %v1250
  %1469 = vmatpush1.bf16.msra.mxu0 %v1249
  %1470 = vmatprep.subr.bf16.mxu0 %v1257
  %1471 = vmatpush1.bf16.msra.mxu0 %v1256
  %1472 = vmatprep.subr.bf16.mxu0 %v1264
  %1473 = vmatpush1.bf16.msra.mxu0 %v1263
  %1474 = vmatprep.subr.bf16.mxu0 %v1271
  %1475 = vmatpush1.bf16.msra.mxu0 %v1270
  %1476 = vmatprep.subr.bf16.mxu0 %v1278
  %1477 = vmatpush1.bf16.msra.mxu0 %v1277
  %1478 = vmatprep.subr.bf16.mxu0 %v1285
  %1479 = vmatpush1.bf16.msra.mxu0 %v1284
  %1480 = vmatprep.subr.bf16.mxu0 %v1292
  %1481 = vmatpush1.bf16.msra.mxu0 %v1291
  %1482 = vmatprep.subr.bf16.mxu0 %v1299
  %1483 = vmatpush1.bf16.msra.mxu0 %v1298
  %1484 = vmatprep.subr.bf16.mxu0 %v1306
  %1485 = vmatpush1.bf16.msra.mxu0 %v1305
  %1486 = vmatprep.subr.bf16.mxu0 %v1313
  %1487 = vmatpush1.bf16.msra.mxu0 %v1312
  %1488 = vmatprep.subr.bf16.mxu0 %v1320
  %1489 = vmatpush1.bf16.msra.mxu0 %v1319
  %1490 = vmatprep.subr.bf16.mxu0 %v1327
  %1491 = vmatpush1.bf16.msra.mxu0 %v1326
  %1492 = vmatprep.subr.bf16.mxu0 %v1334
  %1493 = vmatpush1.bf16.msra.mxu0 %v1333
  %1494 = vmatprep.subr.bf16.mxu0 %v1341
  %1495 = vmatpush1.bf16.msra.mxu0 %v1340
  %1496 = vmatprep.subr.bf16.mxu0 %v1348
  %1497 = vmatpush1.bf16.msra.mxu0 %v1347
  %1498 = vmatprep.mubr.bf16.mxu0 %v710
  %1499 = vmatmul.mubr.bf16.gmra.mrb[0].mxu0 %v709
  %v1500 = vpop.f32.mrb[0].mxu0
  %v1501 = vadd.f32 %v858, %v1500
  %v1502 = vpop.f32.mrb[0].mxu0
  %v1503 = vadd.f32 %v862, %v1502
  %v1504 = vpop.f32.mrb[0].mxu0
  %v1505 = vadd.f32 %v858, %v1504
  %v1506 = vpop.f32.mrb[0].mxu0
  %v1507 = vadd.f32 %v862, %v1506
  %1508 = vmatprep.mubr.bf16.mxu0 %v712
  %1509 = vmatmul.mubr.bf16.gmra.mrb[0].mxu0 %v711
  %v1510 = vpop.f32.mrb[0].mxu0
  %v1511 = vadd.f32 %v858, %v1510
  %v1512 = vpop.f32.mrb[0].mxu0
  %v1513 = vadd.f32 %v862, %v1512
  %v1514 = vpop.f32.mrb[0].mxu0
  %v1515 = vadd.f32 %v858, %v1514
  %v1516 = vpop.f32.mrb[0].mxu0
  %v1517 = vadd.f32 %v862, %v1516
  %1518 = vmatprep.mubr.bf16.mxu0 %v714
  %1519 = vmatmul.mubr.bf16.gmra.mrb[0].mxu0 %v713
  %v1520 = vpop.f32.mrb[0].mxu0
  %v1521 = vadd.f32 %v858, %v1520
  %v1522 = vpop.f32.mrb[0].mxu0
  %v1523 = vadd.f32 %v862, %v1522
  %v1524 = vpop.f32.mrb[0].mxu0
  %v1525 = vadd.f32 %v858, %v1524
  %v1526 = vpop.f32.mrb[0].mxu0
  %v1527 = vadd.f32 %v862, %v1526
  %1528 = vmatprep.mubr.bf16.mxu0 %v716
  %1529 = vmatmul.mubr.bf16.gmra.mrb[0].mxu0 %v715
  %v1530 = vpop.f32.mrb[0].mxu0
  %v1531 = vadd.f32 %v858, %v1530
  %v1532 = vpop.f32.mrb[0].mxu0
  %v1533 = vadd.f32 %v862, %v1532
  %v1534 = vpop.f32.mrb[0].mxu0
  %v1535 = vadd.f32 %v858, %v1534
  %v1536 = vpop.f32.mrb[0].mxu0
  %v1537 = vadd.f32 %v862, %v1536
  %1538 = vmatprep.mubr.bf16.mxu0 %v718
  %1539 = vmatmul.mubr.bf16.gmra.mrb[0].mxu0 %v717
  %v1540 = vpop.f32.mrb[0].mxu0
  %v1541 = vadd.f32 %v858, %v1540
  %v1542 = vpop.f32.mrb[0].mxu0
  %v1543 = vadd.f32 %v862, %v1542
  %v1544 = vpop.f32.mrb[0].mxu0
  %v1545 = vadd.f32 %v858, %v1544
  %v1546 = vpop.f32.mrb[0].mxu0
  %v1547 = vadd.f32 %v862, %v1546
  %1548 = vmatprep.mubr.bf16.mxu0 %v720
  %1549 = vmatmul.mubr.bf16.gmra.mrb[0].mxu0 %v719
  %v1550 = vpop.f32.mrb[0].mxu0
  %v1551 = vadd.f32 %v858, %v1550
  %v1552 = vpop.f32.mrb[0].mxu0
  %v1553 = vadd.f32 %v862, %v1552
  %v1554 = vpop.f32.mrb[0].mxu0
  %v1555 = vadd.f32 %v858, %v1554
  %v1556 = vpop.f32.mrb[0].mxu0
  %v1557 = vadd.f32 %v862, %v1556
  %1558 = vmatprep.mubr.bf16.mxu0 %v722
  %1559 = vmatmul.mubr.bf16.gmra.mrb[0].mxu0 %v721
  %v1560 = vpop.f32.mrb[0].mxu0
  %v1561 = vadd.f32 %v858, %v1560
  %v1562 = vpop.f32.mrb[0].mxu0
  %v1563 = vadd.f32 %v862, %v1562
  %v1564 = vpop.f32.mrb[0].mxu0
  %v1565 = vadd.f32 %v858, %v1564
  %v1566 = vpop.f32.mrb[0].mxu0
  %v1567 = vadd.f32 %v862, %v1566
  %1568 = vmatprep.mubr.bf16.mxu0 %v724
  %1569 = vmatmul.mubr.bf16.gmra.mrb[0].mxu0 %v723
  %v1570 = vpop.f32.mrb[0].mxu0
  %v1571 = vadd.f32 %v858, %v1570
  %v1572 = vpop.f32.mrb[0].mxu0
  %v1573 = vadd.f32 %v862, %v1572
  %v1574 = vpop.f32.mrb[0].mxu0
  %v1575 = vadd.f32 %v858, %v1574
  %v1576 = vpop.f32.mrb[0].mxu0
  %v1577 = vadd.f32 %v862, %v1576
  %1578 = vdwg.mxu0
  %1579 = vmatprep.subr.bf16.mxu0 %v1245
  %1580 = vmatpush1.bf16.msra.mxu0 %v1244
  %1581 = vmatprep.subr.bf16.mxu0 %v1252
  %1582 = vmatpush1.bf16.msra.mxu0 %v1251
  %1583 = vmatprep.subr.bf16.mxu0 %v1259
  %1584 = vmatpush1.bf16.msra.mxu0 %v1258
  %1585 = vmatprep.subr.bf16.mxu0 %v1266
  %1586 = vmatpush1.bf16.msra.mxu0 %v1265
  %1587 = vmatprep.subr.bf16.mxu0 %v1273
  %1588 = vmatpush1.bf16.msra.mxu0 %v1272
  %1589 = vmatprep.subr.bf16.mxu0 %v1280
  %1590 = vmatpush1.bf16.msra.mxu0 %v1279
  %1591 = vmatprep.subr.bf16.mxu0 %v1287
  %1592 = vmatpush1.bf16.msra.mxu0 %v1286
  %1593 = vmatprep.subr.bf16.mxu0 %v1294
  %1594 = vmatpush1.bf16.msra.mxu0 %v1293
  %1595 = vmatprep.subr.bf16.mxu0 %v1301
  %1596 = vmatpush1.bf16.msra.mxu0 %v1300
  %1597 = vmatprep.subr.bf16.mxu0 %v1308
  %1598 = vmatpush1.bf16.msra.mxu0 %v1307
  %1599 = vmatprep.subr.bf16.mxu0 %v1315
  %1600 = vmatpush1.bf16.msra.mxu0 %v1314
  %1601 = vmatprep.subr.bf16.mxu0 %v1322
  %1602 = vmatpush1.bf16.msra.mxu0 %v1321
  %1603 = vmatprep.subr.bf16.mxu0 %v1329
  %1604 = vmatpush1.bf16.msra.mxu0 %v1328
  %1605 = vmatprep.subr.bf16.mxu0 %v1336
  %1606 = vmatpush1.bf16.msra.mxu0 %v1335
  %1607 = vmatprep.subr.bf16.mxu0 %v1343
  %1608 = vmatpush1.bf16.msra.mxu0 %v1342
  %1609 = vmatprep.subr.bf16.mxu0 %v1350
  %1610 = vmatpush1.bf16.msra.mxu0 %v1349
  %1611 = vmatprep.mubr.bf16.mxu0 %v710
  %1612 = vmatmul.mubr.bf16.gmra.mrb[0].mxu0 %v709
  %v1613 = vpop.f32.mrb[0].mxu0
  %v1614 = vadd.f32 %v866, %v1613
  %v1615 = vpop.f32.mrb[0].mxu0
  %v1616 = vadd.f32 %v870, %v1615
  %v1617 = vpop.f32.mrb[0].mxu0
  %v1618 = vadd.f32 %v866, %v1617
  %v1619 = vpop.f32.mrb[0].mxu0
  %v1620 = vadd.f32 %v870, %v1619
  %1621 = vmatprep.mubr.bf16.mxu0 %v712
  %1622 = vmatmul.mubr.bf16.gmra.mrb[0].mxu0 %v711
  %v1623 = vpop.f32.mrb[0].mxu0
  %v1624 = vadd.f32 %v866, %v1623
  %v1625 = vpop.f32.mrb[0].mxu0
  %v1626 = vadd.f32 %v870, %v1625
  %v1627 = vpop.f32.mrb[0].mxu0
  %v1628 = vadd.f32 %v866, %v1627
  %v1629 = vpop.f32.mrb[0].mxu0
  %v1630 = vadd.f32 %v870, %v1629
  %1631 = vmatprep.mubr.bf16.mxu0 %v714
  %1632 = vmatmul.mubr.bf16.gmra.mrb[0].mxu0 %v713
  %v1633 = vpop.f32.mrb[0].mxu0
  %v1634 = vadd.f32 %v866, %v1633
  %v1635 = vpop.f32.mrb[0].mxu0
  %v1636 = vadd.f32 %v870, %v1635
  %v1637 = vpop.f32.mrb[0].mxu0
  %v1638 = vadd.f32 %v866, %v1637
  %v1639 = vpop.f32.mrb[0].mxu0
  %v1640 = vadd.f32 %v870, %v1639
  %1641 = vmatprep.mubr.bf16.mxu0 %v716
  %1642 = vmatmul.mubr.bf16.gmra.mrb[0].mxu0 %v715
  %v1643 = vpop.f32.mrb[0].mxu0
  %v1644 = vadd.f32 %v866, %v1643
  %v1645 = vpop.f32.mrb[0].mxu0
  %v1646 = vadd.f32 %v870, %v1645
  %v1647 = vpop.f32.mrb[0].mxu0
  %v1648 = vadd.f32 %v866, %v1647
  %v1649 = vpop.f32.mrb[0].mxu0
  %v1650 = vadd.f32 %v870, %v1649
  %1651 = vmatprep.mubr.bf16.mxu0 %v718
  %1652 = vmatmul.mubr.bf16.gmra.mrb[0].mxu0 %v717
  %v1653 = vpop.f32.mrb[0].mxu0
  %v1654 = vadd.f32 %v866, %v1653
  %v1655 = vpop.f32.mrb[0].mxu0
  %v1656 = vadd.f32 %v870, %v1655
  %v1657 = vpop.f32.mrb[0].mxu0
  %v1658 = vadd.f32 %v866, %v1657
  %v1659 = vpop.f32.mrb[0].mxu0
  %v1660 = vadd.f32 %v870, %v1659
  %1661 = vmatprep.mubr.bf16.mxu0 %v720
  %1662 = vmatmul.mubr.bf16.gmra.mrb[0].mxu0 %v719
  %v1663 = vpop.f32.mrb[0].mxu0
  %v1664 = vadd.f32 %v866, %v1663
  %v1665 = vpop.f32.mrb[0].mxu0
  %v1666 = vadd.f32 %v870, %v1665
  %v1667 = vpop.f32.mrb[0].mxu0
  %v1668 = vadd.f32 %v866, %v1667
  %v1669 = vpop.f32.mrb[0].mxu0
  %v1670 = vadd.f32 %v870, %v1669
  %1671 = vmatprep.mubr.bf16.mxu0 %v722
  %1672 = vmatmul.mubr.bf16.gmra.mrb[0].mxu0 %v721
  %v1673 = vpop.f32.mrb[0].mxu0
  %v1674 = vadd.f32 %v866, %v1673
  %v1675 = vpop.f32.mrb[0].mxu0
  %v1676 = vadd.f32 %v870, %v1675
  %v1677 = vpop.f32.mrb[0].mxu0
  %v1678 = vadd.f32 %v866, %v1677
  %v1679 = vpop.f32.mrb[0].mxu0
  %v1680 = vadd.f32 %v870, %v1679
  %1681 = vmatprep.mubr.bf16.mxu0 %v724
  %1682 = vmatmul.mubr.bf16.gmra.mrb[0].mxu0 %v723
  %v1683 = vpop.f32.mrb[0].mxu0
  %v1684 = vadd.f32 %v866, %v1683
  %v1685 = vpop.f32.mrb[0].mxu0
  %v1686 = vadd.f32 %v870, %v1685
  %v1687 = vpop.f32.mrb[0].mxu0
  %v1688 = vadd.f32 %v866, %v1687
  %v1689 = vpop.f32.mrb[0].mxu0
  %v1690 = vadd.f32 %v870, %v1689
  %1691 = vdwg.mxu0
  %1692 = vmatprep.subr.bf16.mxu0 %v1247
  %1693 = vmatpush1.bf16.msra.mxu0 %v1246
  %1694 = vmatprep.subr.bf16.mxu0 %v1254
  %1695 = vmatpush1.bf16.msra.mxu0 %v1253
  %1696 = vmatprep.subr.bf16.mxu0 %v1261
  %1697 = vmatpush1.bf16.msra.mxu0 %v1260
  %1698 = vmatprep.subr.bf16.mxu0 %v1268
  %1699 = vmatpush1.bf16.msra.mxu0 %v1267
  %1700 = vmatprep.subr.bf16.mxu0 %v1275
  %1701 = vmatpush1.bf16.msra.mxu0 %v1274
  %1702 = vmatprep.subr.bf16.mxu0 %v1282
  %1703 = vmatpush1.bf16.msra.mxu0 %v1281
  %1704 = vmatprep.subr.bf16.mxu0 %v1289
  %1705 = vmatpush1.bf16.msra.mxu0 %v1288
  %1706 = vmatprep.subr.bf16.mxu0 %v1296
  %1707 = vmatpush1.bf16.msra.mxu0 %v1295
  %1708 = vmatprep.subr.bf16.mxu0 %v1303
  %1709 = vmatpush1.bf16.msra.mxu0 %v1302
  %1710 = vmatprep.subr.bf16.mxu0 %v1310
  %1711 = vmatpush1.bf16.msra.mxu0 %v1309
  %1712 = vmatprep.subr.bf16.mxu0 %v1317
  %1713 = vmatpush1.bf16.msra.mxu0 %v1316
  %1714 = vmatprep.subr.bf16.mxu0 %v1324
  %1715 = vmatpush1.bf16.msra.mxu0 %v1323
  %1716 = vmatprep.subr.bf16.mxu0 %v1331
  %1717 = vmatpush1.bf16.msra.mxu0 %v1330
  %1718 = vmatprep.subr.bf16.mxu0 %v1338
  %1719 = vmatpush1.bf16.msra.mxu0 %v1337
  %1720 = vmatprep.subr.bf16.mxu0 %v1345
  %1721 = vmatpush1.bf16.msra.mxu0 %v1344
  %1722 = vmatprep.subr.bf16.mxu0 %v1352
  %1723 = vmatpush1.bf16.msra.mxu0 %v1351
  %1724 = vmatprep.mubr.bf16.mxu0 %v710
  %1725 = vmatmul.mubr.bf16.gmra.mrb[0].mxu0 %v709
  %v1726 = vpop.f32.mrb[0].mxu0
  %v1727 = vadd.f32 %v874, %v1726
  %v1728 = vpop.f32.mrb[0].mxu0
  %v1729 = vadd.f32 %v878, %v1728
  %v1730 = vpop.f32.mrb[0].mxu0
  %v1731 = vadd.f32 %v874, %v1730
  %v1732 = vpop.f32.mrb[0].mxu0
  %v1733 = vadd.f32 %v878, %v1732
  %1734 = vmatprep.mubr.bf16.mxu0 %v712
  %1735 = vmatmul.mubr.bf16.gmra.mrb[0].mxu0 %v711
  %v1736 = vpop.f32.mrb[0].mxu0
  %v1737 = vadd.f32 %v874, %v1736
  %v1738 = vpop.f32.mrb[0].mxu0
  %v1739 = vadd.f32 %v878, %v1738
  %v1740 = vpop.f32.mrb[0].mxu0
  %v1741 = vadd.f32 %v874, %v1740
  %v1742 = vpop.f32.mrb[0].mxu0
  %v1743 = vadd.f32 %v878, %v1742
  %1744 = vmatprep.mubr.bf16.mxu0 %v714
  %1745 = vmatmul.mubr.bf16.gmra.mrb[0].mxu0 %v713
  %v1746 = vpop.f32.mrb[0].mxu0
  %v1747 = vadd.f32 %v874, %v1746
  %v1748 = vpop.f32.mrb[0].mxu0
  %v1749 = vadd.f32 %v878, %v1748
  %v1750 = vpop.f32.mrb[0].mxu0
  %v1751 = vadd.f32 %v874, %v1750
  %v1752 = vpop.f32.mrb[0].mxu0
  %v1753 = vadd.f32 %v878, %v1752
  %1754 = vmatprep.mubr.bf16.mxu0 %v716
  %1755 = vmatmul.mubr.bf16.gmra.mrb[0].mxu0 %v715
  %v1756 = vpop.f32.mrb[0].mxu0
  %v1757 = vadd.f32 %v874, %v1756
  %v1758 = vpop.f32.mrb[0].mxu0
  %v1759 = vadd.f32 %v878, %v1758
  %v1760 = vpop.f32.mrb[0].mxu0
  %v1761 = vadd.f32 %v874, %v1760
  %v1762 = vpop.f32.mrb[0].mxu0
  %v1763 = vadd.f32 %v878, %v1762
  %1764 = vmatprep.mubr.bf16.mxu0 %v718
  %1765 = vmatmul.mubr.bf16.gmra.mrb[0].mxu0 %v717
  %v1766 = vpop.f32.mrb[0].mxu0
  %v1767 = vadd.f32 %v874, %v1766
  %v1768 = vpop.f32.mrb[0].mxu0
  %v1769 = vadd.f32 %v878, %v1768
  %v1770 = vpop.f32.mrb[0].mxu0
  %v1771 = vadd.f32 %v874, %v1770
  %v1772 = vpop.f32.mrb[0].mxu0
  %v1773 = vadd.f32 %v878, %v1772
  %1774 = vmatprep.mubr.bf16.mxu0 %v720
  %1775 = vmatmul.mubr.bf16.gmra.mrb[0].mxu0 %v719
  %v1776 = vpop.f32.mrb[0].mxu0
  %v1777 = vadd.f32 %v874, %v1776
  %v1778 = vpop.f32.mrb[0].mxu0
  %v1779 = vadd.f32 %v878, %v1778
  %v1780 = vpop.f32.mrb[0].mxu0
  %v1781 = vadd.f32 %v874, %v1780
  %v1782 = vpop.f32.mrb[0].mxu0
  %v1783 = vadd.f32 %v878, %v1782
  %1784 = vmatprep.mubr.bf16.mxu0 %v722
  %1785 = vmatmul.mubr.bf16.gmra.mrb[0].mxu0 %v721
  %v1786 = vpop.f32.mrb[0].mxu0
  %v1787 = vadd.f32 %v874, %v1786
  %v1788 = vpop.f32.mrb[0].mxu0
  %v1789 = vadd.f32 %v878, %v1788
  %v1790 = vpop.f32.mrb[0].mxu0
  %v1791 = vadd.f32 %v874, %v1790
  %v1792 = vpop.f32.mrb[0].mxu0
  %v1793 = vadd.f32 %v878, %v1792
  %1794 = vmatprep.mubr.bf16.mxu0 %v724
  %1795 = vmatmul.mubr.bf16.gmra.mrb[0].mxu0 %v723
  %v1796 = vpop.f32.mrb[0].mxu0
  %v1797 = vadd.f32 %v874, %v1796
  %v1798 = vpop.f32.mrb[0].mxu0
  %v1799 = vadd.f32 %v878, %v1798
  %v1800 = vpop.f32.mrb[0].mxu0
  %v1801 = vadd.f32 %v874, %v1800
  %v1802 = vpop.f32.mrb[0].mxu0
  %v1803 = vadd.f32 %v878, %v1802
  %1804 = vdwg.mxu0
  %1805 = vmatprep.subr.bf16.mxu0 0
  %1806 = vmatpush1.bf16.msra.mxu0 %v1248
  %1807 = vmatprep.subr.bf16.mxu0 0
  %1808 = vmatpush1.bf16.msra.mxu0 %v1255
  %1809 = vmatprep.subr.bf16.mxu0 0
  %1810 = vmatpush1.bf16.msra.mxu0 %v1262
  %1811 = vmatprep.subr.bf16.mxu0 0
  %1812 = vmatpush1.bf16.msra.mxu0 %v1269
  %1813 = vmatprep.subr.bf16.mxu0 0
  %1814 = vmatpush1.bf16.msra.mxu0 %v1276
  %1815 = vmatprep.subr.bf16.mxu0 0
  %1816 = vmatpush1.bf16.msra.mxu0 %v1283
  %1817 = vmatprep.subr.bf16.mxu0 0
  %1818 = vmatpush1.bf16.msra.mxu0 %v1290
  %1819 = vmatprep.subr.bf16.mxu0 0
  %1820 = vmatpush1.bf16.msra.mxu0 %v1297
  %1821 = vmatprep.subr.bf16.mxu0 0
  %1822 = vmatpush1.bf16.msra.mxu0 %v1304
  %1823 = vmatprep.subr.bf16.mxu0 0
  %1824 = vmatpush1.bf16.msra.mxu0 %v1311
  %1825 = vmatprep.subr.bf16.mxu0 0
  %1826 = vmatpush1.bf16.msra.mxu0 %v1318
  %1827 = vmatprep.subr.bf16.mxu0 0
  %1828 = vmatpush1.bf16.msra.mxu0 %v1325
  %1829 = vmatprep.subr.bf16.mxu0 0
  %1830 = vmatpush1.bf16.msra.mxu0 %v1332
  %1831 = vmatprep.subr.bf16.mxu0 0
  %1832 = vmatpush1.bf16.msra.mxu0 %v1339
  %1833 = vmatprep.subr.bf16.mxu0 0
  %1834 = vmatpush1.bf16.msra.mxu0 %v1346
  %1835 = vmatprep.subr.bf16.mxu0 0
  %1836 = vmatpush1.bf16.msra.mxu0 %v1353
  %1837 = vmatprep.mubr.bf16.mxu0 %v710
  %1838 = vmatmul.mubr.bf16.gmra.mrb[0].mxu0 %v709
  %v1839 = vpop.f32.mrb[0].mxu0
  %v1840 = vadd.f32 %v882, %v1839
  %v1841 = vpop.f32.mrb[0].mxu0
  %v1842 = vpop.f32.mrb[0].mxu0
  %v1843 = vadd.f32 %v882, %v1842
  %v1844 = vpop.f32.mrb[0].mxu0
  %1845 = vmatprep.mubr.bf16.mxu0 %v712
  %1846 = vmatmul.mubr.bf16.gmra.mrb[0].mxu0 %v711
  %v1847 = vpop.f32.mrb[0].mxu0
  %v1848 = vadd.f32 %v882, %v1847
  %v1849 = vpop.f32.mrb[0].mxu0
  %v1850 = vpop.f32.mrb[0].mxu0
  %v1851 = vadd.f32 %v882, %v1850
  %v1852 = vpop.f32.mrb[0].mxu0
  %1853 = vmatprep.mubr.bf16.mxu0 %v714
  %1854 = vmatmul.mubr.bf16.gmra.mrb[0].mxu0 %v713
  %v1855 = vpop.f32.mrb[0].mxu0
  %v1856 = vadd.f32 %v882, %v1855
  %v1857 = vpop.f32.mrb[0].mxu0
  %v1858 = vpop.f32.mrb[0].mxu0
  %v1859 = vadd.f32 %v882, %v1858
  %v1860 = vpop.f32.mrb[0].mxu0
  %1861 = vmatprep.mubr.bf16.mxu0 %v716
  %1862 = vmatmul.mubr.bf16.gmra.mrb[0].mxu0 %v715
  %v1863 = vpop.f32.mrb[0].mxu0
  %v1864 = vadd.f32 %v882, %v1863
  %v1865 = vpop.f32.mrb[0].mxu0
  %v1866 = vpop.f32.mrb[0].mxu0
  %v1867 = vadd.f32 %v882, %v1866
  %v1868 = vpop.f32.mrb[0].mxu0
  %1869 = vmatprep.mubr.bf16.mxu0 %v718
  %1870 = vmatmul.mubr.bf16.gmra.mrb[0].mxu0 %v717
  %v1871 = vpop.f32.mrb[0].mxu0
  %v1872 = vadd.f32 %v882, %v1871
  %v1873 = vpop.f32.mrb[0].mxu0
  %v1874 = vpop.f32.mrb[0].mxu0
  %v1875 = vadd.f32 %v882, %v1874
  %v1876 = vpop.f32.mrb[0].mxu0
  %1877 = vmatprep.mubr.bf16.mxu0 %v720
  %1878 = vmatmul.mubr.bf16.gmra.mrb[0].mxu0 %v719
  %v1879 = vpop.f32.mrb[0].mxu0
  %v1880 = vadd.f32 %v882, %v1879
  %v1881 = vpop.f32.mrb[0].mxu0
  %v1882 = vpop.f32.mrb[0].mxu0
  %v1883 = vadd.f32 %v882, %v1882
  %v1884 = vpop.f32.mrb[0].mxu0
  %1885 = vmatprep.mubr.bf16.mxu0 %v722
  %1886 = vmatmul.mubr.bf16.gmra.mrb[0].mxu0 %v721
  %v1887 = vpop.f32.mrb[0].mxu0
  %v1888 = vadd.f32 %v882, %v1887
  %v1889 = vpop.f32.mrb[0].mxu0
  %v1890 = vpop.f32.mrb[0].mxu0
  %v1891 = vadd.f32 %v882, %v1890
  %v1892 = vpop.f32.mrb[0].mxu0
  %1893 = vmatprep.mubr.bf16.mxu0 %v724
  %1894 = vmatmul.mubr.bf16.gmra.mrb[0].mxu0 %v723
  %v1895 = vpop.f32.mrb[0].mxu0
  %v1896 = vadd.f32 %v882, %v1895
  %v1897 = vpop.f32.mrb[0].mxu0
  %v1898 = vpop.f32.mrb[0].mxu0
  %v1899 = vadd.f32 %v882, %v1898
  %v1900 = vpop.f32.mrb[0].mxu0
  %1901 = vdwg.mxu0
  %v1902 = vtanh.pop %v1501
  %v1903 = vtanh.pop %v1503
  %v1904 = vtanh.pop %v1614
  %v1905 = vtanh.pop %v1616
  %v1906 = vtanh.pop %v1727
  %v1907 = vtanh.pop %v1729
  %v1908 = vtanh.pop %v1840
  %v1909 = vtanh.pop %v1505
  %v1910 = vtanh.pop %v1507
  %v1911 = vtanh.pop %v1618
  %v1912 = vtanh.pop %v1620
  %v1913 = vtanh.pop %v1731
  %v1914 = vtanh.pop %v1733
  %v1915 = vtanh.pop %v1843
  %v1916 = vtanh.pop %v1511
  %v1917 = vtanh.pop %v1513
  %v1918 = vtanh.pop %v1624
  %v1919 = vtanh.pop %v1626
  %v1920 = vtanh.pop %v1737
  %v1921 = vtanh.pop %v1739
  %v1922 = vtanh.pop %v1848
  %v1923 = vtanh.pop %v1515
  %v1924 = vtanh.pop %v1517
  %v1925 = vtanh.pop %v1628
  %v1926 = vtanh.pop %v1630
  %v1927 = vtanh.pop %v1741
  %v1928 = vtanh.pop %v1743
  %v1929 = vtanh.pop %v1851
  %v1930 = vtanh.pop %v1521
  %v1931 = vtanh.pop %v1523
  %v1932 = vtanh.pop %v1634
  %v1933 = vtanh.pop %v1636
  %v1934 = vtanh.pop %v1747
  %v1935 = vtanh.pop %v1749
  %v1936 = vtanh.pop %v1856
  %v1937 = vtanh.pop %v1525
  %v1938 = vtanh.pop %v1527
  %v1939 = vtanh.pop %v1638
  %v1940 = vtanh.pop %v1640
  %v1941 = vtanh.pop %v1751
  %v1942 = vtanh.pop %v1753
  %v1943 = vtanh.pop %v1859
  %v1944 = vtanh.pop %v1531
  %v1945 = vtanh.pop %v1533
  %v1946 = vtanh.pop %v1644
  %v1947 = vtanh.pop %v1646
  %v1948 = vtanh.pop %v1757
  %v1949 = vtanh.pop %v1759
  %v1950 = vtanh.pop %v1864
  %v1951 = vtanh.pop %v1535
  %v1952 = vtanh.pop %v1537
  %v1953 = vtanh.pop %v1648
  %v1954 = vtanh.pop %v1650
  %v1955 = vtanh.pop %v1761
  %v1956 = vtanh.pop %v1763
  %v1957 = vtanh.pop %v1867
  %v1958 = vtanh.pop %v1541
  %v1959 = vtanh.pop %v1543
  %v1960 = vtanh.pop %v1654
  %v1961 = vtanh.pop %v1656
  %v1962 = vtanh.pop %v1767
  %v1963 = vtanh.pop %v1769
  %v1964 = vtanh.pop %v1872
  %v1965 = vtanh.pop %v1545
  %v1966 = vtanh.pop %v1547
  %v1967 = vtanh.pop %v1658
  %v1968 = vtanh.pop %v1660
  %v1969 = vtanh.pop %v1771
  %v1970 = vtanh.pop %v1773
  %v1971 = vtanh.pop %v1875
  %v1972 = vtanh.pop %v1551
  %v1973 = vtanh.pop %v1553
  %v1974 = vtanh.pop %v1664
  %v1975 = vtanh.pop %v1666
  %v1976 = vtanh.pop %v1777
  %v1977 = vtanh.pop %v1779
  %v1978 = vtanh.pop %v1880
  %v1979 = vtanh.pop %v1555
  %v1980 = vtanh.pop %v1557
  %v1981 = vtanh.pop %v1668
  %v1982 = vtanh.pop %v1670
  %v1983 = vtanh.pop %v1781
  %v1984 = vtanh.pop %v1783
  %v1985 = vtanh.pop %v1883
  %v1986 = vtanh.pop %v1561
  %v1987 = vtanh.pop %v1563
  %v1988 = vtanh.pop %v1674
  %v1989 = vtanh.pop %v1676
  %v1990 = vtanh.pop %v1787
  %v1991 = vtanh.pop %v1789
  %v1992 = vtanh.pop %v1888
  %v1993 = vtanh.pop %v1565
  %v1994 = vtanh.pop %v1567
  %v1995 = vtanh.pop %v1678
  %v1996 = vtanh.pop %v1680
  %v1997 = vtanh.pop %v1791
  %v1998 = vtanh.pop %v1793
  %v1999 = vtanh.pop %v1891
  %v2000 = vtanh.pop %v1571
  %v2001 = vtanh.pop %v1573
  %v2002 = vtanh.pop %v1684
  %v2003 = vtanh.pop %v1686
  %v2004 = vtanh.pop %v1797
  %v2005 = vtanh.pop %v1799
  %v2006 = vtanh.pop %v1896
  %v2007 = vtanh.pop %v1575
  %v2008 = vtanh.pop %v1577
  %v2009 = vtanh.pop %v1688
  %v2010 = vtanh.pop %v1690
  %v2011 = vtanh.pop %v1801
  %v2012 = vtanh.pop %v1803
  %v2013 = vtanh.pop %v1899
  %2014 = vst [vmem:[%s7] sm:$0xff] %v1902
  %2015 = vst [vmem:[%s7 + $0x8] sm:$0xff] %v1903
  %2016 = vst [vmem:[%s7 + $0x10] sm:$0xff] %v1904
  %2017 = vst [vmem:[%s7 + $0x18] sm:$0xff] %v1905
  %2018 = vst [vmem:[%s7 + $0x20] sm:$0xff] %v1906
  %2019 = vst [vmem:[%s7 + $0x28] sm:$0xff] %v1907
  %2020 = vst [vmem:[%s7 + $0x30] sm:$0xff] %v1908
  %2021 = vst [vmem:[%s7 + $0x38] sm:$0xff] %v1909
  %2022 = vst [vmem:[%s7 + $0x40] sm:$0xff] %v1910
  %2023 = vst [vmem:[%s7 + $0x48] sm:$0xff] %v1911
  %2024 = vst [vmem:[%s7 + $0x50] sm:$0xff] %v1912
  %2025 = vst [vmem:[%s7 + $0x58] sm:$0xff] %v1913
  %2026 = vst [vmem:[%s7 + $0x60] sm:$0xff] %v1914
  %2027 = vst [vmem:[%s7 + $0x68] sm:$0xff] %v1915
  %2028 = vst [vmem:[%s7 + $0x70] sm:$0xff] %v1916
  %2029 = vst [vmem:[%s7 + $0x78] sm:$0xff] %v1917
  %2030 = vst [vmem:[%s7 + $0x80] sm:$0xff] %v1918
  %2031 = vst [vmem:[%s7 + $0x88] sm:$0xff] %v1919
  %2032 = vst [vmem:[%s7 + $0x90] sm:$0xff] %v1920
  %2033 = vst [vmem:[%s7 + $0x98] sm:$0xff] %v1921
  %2034 = vst [vmem:[%s7 + $0xa0] sm:$0xff] %v1922
  %2035 = vst [vmem:[%s7 + $0xa8] sm:$0xff] %v1923
  %2036 = vst [vmem:[%s7 + $0xb0] sm:$0xff] %v1924
  %2037 = vst [vmem:[%s7 + $0xb8] sm:$0xff] %v1925
  %2038 = vst [vmem:[%s7 + $0xc0] sm:$0xff] %v1926
  %2039 = vst [vmem:[%s7 + $0xc8] sm:$0xff] %v1927
  %2040 = vst [vmem:[%s7 + $0xd0] sm:$0xff] %v1928
  %2041 = vst [vmem:[%s7 + $0xd8] sm:$0xff] %v1929
  %2042 = vst [vmem:[%s7 + $0xe0] sm:$0xff] %v1930
  %2043 = vst [vmem:[%s7 + $0xe8] sm:$0xff] %v1931
  %2044 = vst [vmem:[%s7 + $0xf0] sm:$0xff] %v1932
  %2045 = vst [vmem:[%s7 + $0xf8] sm:$0xff] %v1933
  %2046 = vst [vmem:[%s7 + $0x100] sm:$0xff] %v1934
  %2047 = vst [vmem:[%s7 + $0x108] sm:$0xff] %v1935
  %2048 = vst [vmem:[%s7 + $0x110] sm:$0xff] %v1936
  %2049 = vst [vmem:[%s7 + $0x118] sm:$0xff] %v1937
  %2050 = vst [vmem:[%s7 + $0x120] sm:$0xff] %v1938
  %2051 = vst [vmem:[%s7 + $0x128] sm:$0xff] %v1939
  %2052 = vst [vmem:[%s7 + $0x130] sm:$0xff] %v1940
  %2053 = vst [vmem:[%s7 + $0x138] sm:$0xff] %v1941
  %2054 = vst [vmem:[%s7 + $0x140] sm:$0xff] %v1942
  %2055 = vst [vmem:[%s7 + $0x148] sm:$0xff] %v1943
  %2056 = vst [vmem:[%s7 + $0x150] sm:$0xff] %v1944
  %2057 = vst [vmem:[%s7 + $0x158] sm:$0xff] %v1945
  %2058 = vst [vmem:[%s7 + $0x160] sm:$0xff] %v1946
  %2059 = vst [vmem:[%s7 + $0x168] sm:$0xff] %v1947
  %2060 = vst [vmem:[%s7 + $0x170] sm:$0xff] %v1948
  %2061 = vst [vmem:[%s7 + $0x178] sm:$0xff] %v1949
  %2062 = vst [vmem:[%s7 + $0x180] sm:$0xff] %v1950
  %2063 = vst [vmem:[%s7 + $0x188] sm:$0xff] %v1951
  %2064 = vst [vmem:[%s7 + $0x190] sm:$0xff] %v1952
  %2065 = vst [vmem:[%s7 + $0x198] sm:$0xff] %v1953
  %2066 = vst [vmem:[%s7 + $0x1a0] sm:$0xff] %v1954
  %2067 = vst [vmem:[%s7 + $0x1a8] sm:$0xff] %v1955
  %2068 = vst [vmem:[%s7 + $0x1b0] sm:$0xff] %v1956
  %2069 = vst [vmem:[%s7 + $0x1b8] sm:$0xff] %v1957
  %2070 = vst [vmem:[%s7 + $0x1c0] sm:$0xff] %v1958
  %2071 = vst [vmem:[%s7 + $0x1c8] sm:$0xff] %v1959
  %2072 = vst [vmem:[%s7 + $0x1d0] sm:$0xff] %v1960
  %2073 = vst [vmem:[%s7 + $0x1d8] sm:$0xff] %v1961
  %2074 = vst [vmem:[%s7 + $0x1e0] sm:$0xff] %v1962
  %2075 = vst [vmem:[%s7 + $0x1e8] sm:$0xff] %v1963
  %2076 = vst [vmem:[%s7 + $0x1f0] sm:$0xff] %v1964
  %2077 = vst [vmem:[%s7 + $0x1f8] sm:$0xff] %v1965
  %2078 = vst [vmem:[%s7 + $0x200] sm:$0xff] %v1966
  %2079 = vst [vmem:[%s7 + $0x208] sm:$0xff] %v1967
  %2080 = vst [vmem:[%s7 + $0x210] sm:$0xff] %v1968
  %2081 = vst [vmem:[%s7 + $0x218] sm:$0xff] %v1969
  %2082 = vst [vmem:[%s7 + $0x220] sm:$0xff] %v1970
  %2083 = vst [vmem:[%s7 + $0x228] sm:$0xff] %v1971
  %2084 = vst [vmem:[%s7 + $0x230] sm:$0xff] %v1972
  %2085 = vst [vmem:[%s7 + $0x238] sm:$0xff] %v1973
  %2086 = vst [vmem:[%s7 + $0x240] sm:$0xff] %v1974
  %2087 = vst [vmem:[%s7 + $0x248] sm:$0xff] %v1975
  %2088 = vst [vmem:[%s7 + $0x250] sm:$0xff] %v1976
  %2089 = vst [vmem:[%s7 + $0x258] sm:$0xff] %v1977
  %2090 = vst [vmem:[%s7 + $0x260] sm:$0xff] %v1978
  %2091 = vst [vmem:[%s7 + $0x268] sm:$0xff] %v1979
  %2092 = vst [vmem:[%s7 + $0x270] sm:$0xff] %v1980
  %2093 = vst [vmem:[%s7 + $0x278] sm:$0xff] %v1981
  %2094 = vst [vmem:[%s7 + $0x280] sm:$0xff] %v1982
  %2095 = vst [vmem:[%s7 + $0x288] sm:$0xff] %v1983
  %2096 = vst [vmem:[%s7 + $0x290] sm:$0xff] %v1984
  %2097 = vst [vmem:[%s7 + $0x298] sm:$0xff] %v1985
  %2098 = vst [vmem:[%s7 + $0x2a0] sm:$0xff] %v1986
  %2099 = vst [vmem:[%s7 + $0x2a8] sm:$0xff] %v1987
  %2100 = vst [vmem:[%s7 + $0x2b0] sm:$0xff] %v1988
  %2101 = vst [vmem:[%s7 + $0x2b8] sm:$0xff] %v1989
  %2102 = vst [vmem:[%s7 + $0x2c0] sm:$0xff] %v1990
  %2103 = vst [vmem:[%s7 + $0x2c8] sm:$0xff] %v1991
  %2104 = vst [vmem:[%s7 + $0x2d0] sm:$0xff] %v1992
  %2105 = vst [vmem:[%s7 + $0x2d8] sm:$0xff] %v1993
  %2106 = vst [vmem:[%s7 + $0x2e0] sm:$0xff] %v1994
  %2107 = vst [vmem:[%s7 + $0x2e8] sm:$0xff] %v1995
  %2108 = vst [vmem:[%s7 + $0x2f0] sm:$0xff] %v1996
  %2109 = vst [vmem:[%s7 + $0x2f8] sm:$0xff] %v1997
  %2110 = vst [vmem:[%s7 + $0x300] sm:$0xff] %v1998
  %2111 = vst [vmem:[%s7 + $0x308] sm:$0xff] %v1999
  %2112 = vst [vmem:[%s7 + $0x310] sm:$0xff] %v2000
  %2113 = vst [vmem:[%s7 + $0x318] sm:$0xff] %v2001
  %2114 = vst [vmem:[%s7 + $0x320] sm:$0xff] %v2002
  %2115 = vst [vmem:[%s7 + $0x328] sm:$0xff] %v2003
  %2116 = vst [vmem:[%s7 + $0x330] sm:$0xff] %v2004
  %2117 = vst [vmem:[%s7 + $0x338] sm:$0xff] %v2005
  %2118 = vst [vmem:[%s7 + $0x340] sm:$0xff] %v2006
  %2119 = vst [vmem:[%s7 + $0x348] sm:$0xff] %v2007
  %2120 = vst [vmem:[%s7 + $0x350] sm:$0xff] %v2008
  %2121 = vst [vmem:[%s7 + $0x358] sm:$0xff] %v2009
  %2122 = vst [vmem:[%s7 + $0x360] sm:$0xff] %v2010
  %2123 = vst [vmem:[%s7 + $0x368] sm:$0xff] %v2011
  %2124 = vst [vmem:[%s7 + $0x370] sm:$0xff] %v2012
  %2125 = vst [vmem:[%s7 + $0x378] sm:$0xff] %v2013
  // Predicated region
  $region30: #{vanilla_g_forward.1} parent=0 // pred_check
    _
  $region31: #{vanilla_g_forward.1} parent=0 // pred_check_branch
    %2127 = sbr.rel (0) target = $region33
  $region32: #{vanilla_g_forward.1} parent=0 // pred_region
    _
  $region33: #{vanilla_g_forward.1} parent=0 // pred_fallthru
    _
  // Predicated region
  $region34: #{vanilla_g_forward.1} parent=0 // pred_check
    _
  $region35: #{vanilla_g_forward.1} parent=0 // pred_check_branch
    %2129 = sbr.rel (0) target = $region37
  $region36: #{vanilla_g_forward.1} parent=0 // pred_region
    _
  $region37: #{vanilla_g_forward.1} parent=0 // pred_fallthru
    _

</llo_original>
